<compile_context>
chip_gen: v5e
topology: v5e:2x2
jax: 0.10.0
libtpu: 0.0.40
codegen_flags: <defaults>
</compile_context>

<pallas_src>
import jax
import jax.numpy as jnp
from jax import lax
from jax.experimental import pallas as pl
from jax.experimental.pallas import tpu as pltpu

IN_FEATURES = 3 * 64 * 64    # 12288
OUT_FEATURES = 6
W_ROWS = 8                   # OUT_FEATURES padded to a sublane multiple (once)
MAX_TILE_B = 256             # 12 MiB x-tile -> 24 MiB double-buffered; OK on v5e/v6e/v7x
VMEM_LIMIT_BYTES = 48 << 20  # above v5e's 16 MiB default scope, under v7x's 64 MiB/TC


def _linear_kernel(x_ref, w_ref, b_ref, o_ref):
    """One batch tile: o = x_tile @ W.T + b (f32 accumulate on the MXU).

    x_ref: (TB, K) f32, w_ref: (W_ROWS, K) f32, b_ref: (1, W_ROWS) f32,
    o_ref: (TB, W_ROWS) f32.
    """
    acc = lax.dot_general(
        x_ref[...], w_ref[...],
        dimension_numbers=(((1,), (1,)), ((), ())),   # contract K with K
        preferred_element_type=jnp.float32,
    )
    o_ref[...] = (acc + b_ref[...]).astype(o_ref.dtype)


def _round_up(n, m):
    return ((n + m - 1) // m) * m


@jax.jit
def linear_classifier_forward(x, w_pad, b_pad):
    """Pallas implementation of LinearClassifier.forward.

    x     : (B, 3, 64, 64) float32
    w_pad : (W_ROWS, IN_FEATURES) float32  -- torch (out,in) weight, rows 6..7 zero
    b_pad : (1, W_ROWS) float32            -- bias, cols 6..7 zero
    returns (B, 6) float32
    """
    batch = x.shape[0]
    # Flatten exactly like torch's x.view(B, -1) (row-major over C,H,W).
    x_flat = x.reshape(batch, -1)
    assert x_flat.shape[1] == IN_FEATURES

    # Batch tile: at most MAX_TILE_B rows, at least an 8-row sublane block.
    tile_b = min(MAX_TILE_B, _round_up(batch, 8))
    padded_b = _round_up(batch, tile_b)
    if padded_b != batch:
        # Zero rows produce logits == bias; they are sliced off below.
        x_flat = jnp.pad(x_flat, ((0, padded_b - batch), (0, 0)))

    out = pl.pallas_call(
        _linear_kernel,
        out_shape=jax.ShapeDtypeStruct((padded_b, W_ROWS), jnp.float32),
        grid=(padded_b // tile_b,),
        in_specs=[
            pl.BlockSpec((tile_b, IN_FEATURES), lambda i: (i, 0)),   # streamed x tile
            pl.BlockSpec((W_ROWS, IN_FEATURES), lambda i: (0, 0)),   # resident weight
            pl.BlockSpec((1, W_ROWS), lambda i: (0, 0)),             # resident bias
        ],
        out_specs=pl.BlockSpec((tile_b, W_ROWS), lambda i: (i, 0)),
        compiler_params=pltpu.CompilerParams(
            dimension_semantics=("parallel",),       # lets v7x use both TCs
            vmem_limit_bytes=VMEM_LIMIT_BYTES,
        ),
    )(x_flat, w_pad, b_pad)

    # Single fused slice: drop padded batch rows and padded logit columns.
    return out[:batch, :OUT_FEATURES]


def init_params(key):
    """Deterministic init mirroring nn.Linear(12288, 6) parameter shapes."""
    kw, kb = jax.random.split(key)
    bound = 1.0 / (IN_FEATURES ** 0.5)  # PyTorch default uniform bound
    w = jax.random.uniform(
        kw, (OUT_FEATURES, IN_FEATURES), jnp.float32, -bound, bound
    )
    b = jax.random.uniform(kb, (OUT_FEATURES,), jnp.float32, -bound, bound)
    return w, b


def prepare_params(w, b):
    """One-time padding of parameters to TPU-friendly shapes (not per call)."""
    w_pad = jnp.zeros((W_ROWS, IN_FEATURES), w.dtype).at[:OUT_FEATURES, :].set(w)
    b_pad = jnp.zeros((1, W_ROWS), b.dtype).at[0, :OUT_FEATURES].set(b)
    return w_pad, b_pad


if __name__ == "__main__":
    key = jax.random.PRNGKey(0)
    k_x, k_p = jax.random.split(key)

    batch = 2
    x = jax.random.normal(k_x, (batch, 3, 64, 64), jnp.float32)
    w, b = init_params(k_p)
    w_pad, b_pad = prepare_params(w, b)   # one-time, outside the forward pass

    y = linear_classifier_forward(x, w_pad, b_pad)
    y = jax.block_until_ready(y)

    # Reference check in plain JAX (torch semantics: x.view(B,-1) @ W.T + b).
    y_ref = x.reshape(batch, -1) @ w.T + b
    assert y.shape == (batch, OUT_FEATURES), y.shape
    assert jnp.allclose(y, y_ref, atol=1e-4, rtol=1e-4)

    print("KERNEL_OK")
</pallas_src>

<mosaic_0001>
module attributes {stable_mosaic.version = 11 : i64} {
  func.func @_linear_kernel(%arg0: i32, %arg1: memref<8x12288xf32, #tpu.memory_space<vmem>>, %arg2: memref<8x12288xf32, #tpu.memory_space<vmem>>, %arg3: memref<1x8xf32, #tpu.memory_space<vmem>>, %arg4: memref<8x8xf32, #tpu.memory_space<vmem>>) attributes {dimension_semantics = [#tpu.dimension_semantics<parallel>], iteration_bounds = array<i64: 1>, scalar_prefetch = 0 : i64, scratch_operands = 0 : i64, tpu.core_type = #tpu.core_type<tc>, window_params = [{transform_indices = @transform_0, window_bounds = array<i64: 8, 12288>}, {pipeline_mode = #tpu.pipeline_mode<synchronous>, transform_indices = @transform_1, window_bounds = array<i64: 8, 12288>}, {pipeline_mode = #tpu.pipeline_mode<synchronous>, transform_indices = @transform_2, window_bounds = array<i64: 1, 8>}, {transform_indices = @transform_3, window_bounds = array<i64: 8, 8>}]} {
    %c0 = arith.constant 0 : index
    %c0_0 = arith.constant 0 : index
    %0 = vector.load %arg1[%c0, %c0_0] : memref<8x12288xf32, #tpu.memory_space<vmem>>, vector<8x12288xf32>
    %c0_1 = arith.constant 0 : index
    %c0_2 = arith.constant 0 : index
    %1 = vector.load %arg2[%c0_1, %c0_2] : memref<8x12288xf32, #tpu.memory_space<vmem>>, vector<8x12288xf32>
    %cst = arith.constant dense<0.000000e+00> : vector<8x8xf32>
    %2 = tpu.matmul %0, %1, %cst {dimension_numbers = #tpu.dot_dimension_numbers<[1], [1], [0], [0], [0, 0, 1, 0], [], []>} : vector<8x12288xf32>, vector<8x12288xf32>, vector<8x8xf32> -> vector<8x8xf32>
    %c0_3 = arith.constant 0 : index
    %c0_4 = arith.constant 0 : index
    %3 = vector.load %arg3[%c0_3, %c0_4] : memref<1x8xf32, #tpu.memory_space<vmem>>, vector<1x8xf32>
    %4 = vector.broadcast %3 : vector<1x8xf32> to vector<8x8xf32>
    %5 = arith.addf %2, %4 : vector<8x8xf32>
    %c0_5 = arith.constant 0 : index
    %c0_6 = arith.constant 0 : index
    %6 = vector.load %arg4[%c0_5, %c0_6] : memref<8x8xf32, #tpu.memory_space<vmem>>, vector<8x8xf32>
    tpu.vector_store %arg4[%c0_5, %c0_6], %5 {strides = array<i32>} : memref<8x8xf32, #tpu.memory_space<vmem>>, vector<8x8xf32>,
    return
  }
  func.func @transform_0(%arg0: i32) -> (i32, i32) {
    %c0_i32 = arith.constant 0 : i32
    %c0_i32_0 = arith.constant 0 : i32
    return %arg0, %c0_i32 : i32, i32
  }
  func.func @transform_1(%arg0: i32) -> (i32, i32) {
    %c0_i32 = arith.constant 0 : i32
    %c0_i32_0 = arith.constant 0 : i32
    %c0_i32_1 = arith.constant 0 : i32
    return %c0_i32, %c0_i32_0 : i32, i32
  }
  func.func @transform_2(%arg0: i32) -> (i32, i32) {
    %c0_i32 = arith.constant 0 : i32
    %c0_i32_0 = arith.constant 0 : i32
    %c0_i32_1 = arith.constant 0 : i32
    return %c0_i32, %c0_i32_0 : i32, i32
  }
  func.func @transform_3(%arg0: i32) -> (i32, i32) {
    %c0_i32 = arith.constant 0 : i32
    %c0_i32_0 = arith.constant 0 : i32
    return %arg0, %c0_i32 : i32, i32
  }
}

</mosaic_0001>

<llo_original>
// kernel: linear_classifier_forward.1
$region0: #{linear_classifier_forward.1}
  #allocation0 [shape = 'u32[]', space=smem, size = 0x4, offset = 0x4, fixed_abs, tag = 'smem constant byte address 0x4 - core index']
  #allocation1 [shape = 'u32[72,128]{1,0:T(1,128)}', space=vmem, size = 0x9000, scoped, tag = 'internal scratch']
  %s0 = inlined_call_operand.vmem [shape: f32[8,12288], index: 0, kind: input, shape index: {}]
  %s1 = inlined_call_operand.vmem [shape: f32[8,12288], index: 1, kind: input, shape index: {}]
  %s2 = inlined_call_operand.vmem [shape: f32[1,8], index: 2, kind: input, shape index: {}]
  %s3 = inlined_call_operand.vmem [shape: f32[8,8], index: 3, kind: output, shape index: {}]
  %s4 = sld [smem:[#allocation0]]
  $region22: #{linear_classifier_forward.1} parent=0
    _
  %s6 = ssub.s32 1, %s4
  %s7 = scalar_select 0, %s6, %s4
  // Predicated region
  $region2: #{linear_classifier_forward.1} parent=0 // pred_check
    _
  $region3: #{linear_classifier_forward.1} parent=0 // pred_check_branch
    %9 = sbr.rel (0) target = $region5
  $region4: #{linear_classifier_forward.1} parent=0 // pred_region
    _
  $region5: #{linear_classifier_forward.1} parent=0 // pred_fallthru
    _
  // Predicated region
  $region6: #{linear_classifier_forward.1} parent=0 // pred_check
    _
  $region7: #{linear_classifier_forward.1} parent=0 // pred_check_branch
    %11 = sbr.rel (0) target = $region9
  $region8: #{linear_classifier_forward.1} parent=0 // pred_region
    _
  $region9: #{linear_classifier_forward.1} parent=0 // pred_fallthru
    _
  // Predicated region
  $region10: #{linear_classifier_forward.1} parent=0 // pred_check
    _
  $region11: #{linear_classifier_forward.1} parent=0 // pred_check_branch
    %13 = sbr.rel (0) target = $region13
  $region12: #{linear_classifier_forward.1} parent=0 // pred_region
    _
  $region13: #{linear_classifier_forward.1} parent=0 // pred_fallthru
    _
  %v14 = vld [vmem:[%s0] sm:$0xff]
  %v15 = vld [vmem:[%s0 + $0x8] sm:$0xff]
  %v16 = vld [vmem:[%s0 + $0x10] sm:$0xff]
  %v17 = vld [vmem:[%s0 + $0x18] sm:$0xff]
  %v18 = vld [vmem:[%s0 + $0x20] sm:$0xff]
  %v19 = vld [vmem:[%s0 + $0x28] sm:$0xff]
  %v20 = vld [vmem:[%s0 + $0x30] sm:$0xff]
  %v21 = vld [vmem:[%s0 + $0x38] sm:$0xff]
  %v22 = vld [vmem:[%s0 + $0x40] sm:$0xff]
  %v23 = vld [vmem:[%s0 + $0x48] sm:$0xff]
  %v24 = vld [vmem:[%s0 + $0x50] sm:$0xff]
  %v25 = vld [vmem:[%s0 + $0x58] sm:$0xff]
  %v26 = vld [vmem:[%s0 + $0x60] sm:$0xff]
  %v27 = vld [vmem:[%s0 + $0x68] sm:$0xff]
  %v28 = vld [vmem:[%s0 + $0x70] sm:$0xff]
  %v29 = vld [vmem:[%s0 + $0x78] sm:$0xff]
  %v30 = vld [vmem:[%s0 + $0x80] sm:$0xff]
  %v31 = vld [vmem:[%s0 + $0x88] sm:$0xff]
  %v32 = vld [vmem:[%s0 + $0x90] sm:$0xff]
  %v33 = vld [vmem:[%s0 + $0x98] sm:$0xff]
  %v34 = vld [vmem:[%s0 + $0xa0] sm:$0xff]
  %v35 = vld [vmem:[%s0 + $0xa8] sm:$0xff]
  %v36 = vld [vmem:[%s0 + $0xb0] sm:$0xff]
  %v37 = vld [vmem:[%s0 + $0xb8] sm:$0xff]
  %v38 = vld [vmem:[%s0 + $0xc0] sm:$0xff]
  %v39 = vld [vmem:[%s0 + $0xc8] sm:$0xff]
  %v40 = vld [vmem:[%s0 + $0xd0] sm:$0xff]
  %v41 = vld [vmem:[%s0 + $0xd8] sm:$0xff]
  %v42 = vld [vmem:[%s0 + $0xe0] sm:$0xff]
  %v43 = vld [vmem:[%s0 + $0xe8] sm:$0xff]
  %v44 = vld [vmem:[%s0 + $0xf0] sm:$0xff]
  %v45 = vld [vmem:[%s0 + $0xf8] sm:$0xff]
  %v46 = vld [vmem:[%s0 + $0x100] sm:$0xff]
  %v47 = vld [vmem:[%s0 + $0x108] sm:$0xff]
  %v48 = vld [vmem:[%s0 + $0x110] sm:$0xff]
  %v49 = vld [vmem:[%s0 + $0x118] sm:$0xff]
  %v50 = vld [vmem:[%s0 + $0x120] sm:$0xff]
  %v51 = vld [vmem:[%s0 + $0x128] sm:$0xff]
  %v52 = vld [vmem:[%s0 + $0x130] sm:$0xff]
  %v53 = vld [vmem:[%s0 + $0x138] sm:$0xff]
  %v54 = vld [vmem:[%s0 + $0x140] sm:$0xff]
  %v55 = vld [vmem:[%s0 + $0x148] sm:$0xff]
  %v56 = vld [vmem:[%s0 + $0x150] sm:$0xff]
  %v57 = vld [vmem:[%s0 + $0x158] sm:$0xff]
  %v58 = vld [vmem:[%s0 + $0x160] sm:$0xff]
  %v59 = vld [vmem:[%s0 + $0x168] sm:$0xff]
  %v60 = vld [vmem:[%s0 + $0x170] sm:$0xff]
  %v61 = vld [vmem:[%s0 + $0x178] sm:$0xff]
  %v62 = vld [vmem:[%s0 + $0x180] sm:$0xff]
  %v63 = vld [vmem:[%s0 + $0x188] sm:$0xff]
  %v64 = vld [vmem:[%s0 + $0x190] sm:$0xff]
  %v65 = vld [vmem:[%s0 + $0x198] sm:$0xff]
  %v66 = vld [vmem:[%s0 + $0x1a0] sm:$0xff]
  %v67 = vld [vmem:[%s0 + $0x1a8] sm:$0xff]
  %v68 = vld [vmem:[%s0 + $0x1b0] sm:$0xff]
  %v69 = vld [vmem:[%s0 + $0x1b8] sm:$0xff]
  %v70 = vld [vmem:[%s0 + $0x1c0] sm:$0xff]
  %v71 = vld [vmem:[%s0 + $0x1c8] sm:$0xff]
  %v72 = vld [vmem:[%s0 + $0x1d0] sm:$0xff]
  %v73 = vld [vmem:[%s0 + $0x1d8] sm:$0xff]
  %v74 = vld [vmem:[%s0 + $0x1e0] sm:$0xff]
  %v75 = vld [vmem:[%s0 + $0x1e8] sm:$0xff]
  %v76 = vld [vmem:[%s0 + $0x1f0] sm:$0xff]
  %v77 = vld [vmem:[%s0 + $0x1f8] sm:$0xff]
  %v78 = vld [vmem:[%s0 + $0x200] sm:$0xff]
  %v79 = vld [vmem:[%s0 + $0x208] sm:$0xff]
  %v80 = vld [vmem:[%s0 + $0x210] sm:$0xff]
  %v81 = vld [vmem:[%s0 + $0x218] sm:$0xff]
  %v82 = vld [vmem:[%s0 + $0x220] sm:$0xff]
  %v83 = vld [vmem:[%s0 + $0x228] sm:$0xff]
  %v84 = vld [vmem:[%s0 + $0x230] sm:$0xff]
  %v85 = vld [vmem:[%s0 + $0x238] sm:$0xff]
  %v86 = vld [vmem:[%s0 + $0x240] sm:$0xff]
  %v87 = vld [vmem:[%s0 + $0x248] sm:$0xff]
  %v88 = vld [vmem:[%s0 + $0x250] sm:$0xff]
  %v89 = vld [vmem:[%s0 + $0x258] sm:$0xff]
  %v90 = vld [vmem:[%s0 + $0x260] sm:$0xff]
  %v91 = vld [vmem:[%s0 + $0x268] sm:$0xff]
  %v92 = vld [vmem:[%s0 + $0x270] sm:$0xff]
  %v93 = vld [vmem:[%s0 + $0x278] sm:$0xff]
  %v94 = vld [vmem:[%s0 + $0x280] sm:$0xff]
  %v95 = vld [vmem:[%s0 + $0x288] sm:$0xff]
  %v96 = vld [vmem:[%s0 + $0x290] sm:$0xff]
  %v97 = vld [vmem:[%s0 + $0x298] sm:$0xff]
  %v98 = vld [vmem:[%s0 + $0x2a0] sm:$0xff]
  %v99 = vld [vmem:[%s0 + $0x2a8] sm:$0xff]
  %v100 = vld [vmem:[%s0 + $0x2b0] sm:$0xff]
  %v101 = vld [vmem:[%s0 + $0x2b8] sm:$0xff]
  %v102 = vld [vmem:[%s0 + $0x2c0] sm:$0xff]
  %v103 = vld [vmem:[%s0 + $0x2c8] sm:$0xff]
  %v104 = vld [vmem:[%s0 + $0x2d0] sm:$0xff]
  %v105 = vld [vmem:[%s0 + $0x2d8] sm:$0xff]
  %v106 = vld [vmem:[%s0 + $0x2e0] sm:$0xff]
  %v107 = vld [vmem:[%s0 + $0x2e8] sm:$0xff]
  %v108 = vld [vmem:[%s0 + $0x2f0] sm:$0xff]
  %v109 = vld [vmem:[%s0 + $0x2f8] sm:$0xff]
  %v110 = vld [vmem:[%s1] sm:$0xff]
  %v111 = vld [vmem:[%s1 + $0x8] sm:$0xff]
  %v112 = vld [vmem:[%s1 + $0x10] sm:$0xff]
  %v113 = vld [vmem:[%s1 + $0x18] sm:$0xff]
  %v114 = vld [vmem:[%s1 + $0x20] sm:$0xff]
  %v115 = vld [vmem:[%s1 + $0x28] sm:$0xff]
  %v116 = vld [vmem:[%s1 + $0x30] sm:$0xff]
  %v117 = vld [vmem:[%s1 + $0x38] sm:$0xff]
  %v118 = vld [vmem:[%s1 + $0x40] sm:$0xff]
  %v119 = vld [vmem:[%s1 + $0x48] sm:$0xff]
  %v120 = vld [vmem:[%s1 + $0x50] sm:$0xff]
  %v121 = vld [vmem:[%s1 + $0x58] sm:$0xff]
  %v122 = vld [vmem:[%s1 + $0x60] sm:$0xff]
  %v123 = vld [vmem:[%s1 + $0x68] sm:$0xff]
  %v124 = vld [vmem:[%s1 + $0x70] sm:$0xff]
  %v125 = vld [vmem:[%s1 + $0x78] sm:$0xff]
  %v126 = vld [vmem:[%s1 + $0x80] sm:$0xff]
  %v127 = vld [vmem:[%s1 + $0x88] sm:$0xff]
  %v128 = vld [vmem:[%s1 + $0x90] sm:$0xff]
  %v129 = vld [vmem:[%s1 + $0x98] sm:$0xff]
  %v130 = vld [vmem:[%s1 + $0xa0] sm:$0xff]
  %v131 = vld [vmem:[%s1 + $0xa8] sm:$0xff]
  %v132 = vld [vmem:[%s1 + $0xb0] sm:$0xff]
  %v133 = vld [vmem:[%s1 + $0xb8] sm:$0xff]
  %v134 = vld [vmem:[%s1 + $0xc0] sm:$0xff]
  %v135 = vld [vmem:[%s1 + $0xc8] sm:$0xff]
  %v136 = vld [vmem:[%s1 + $0xd0] sm:$0xff]
  %v137 = vld [vmem:[%s1 + $0xd8] sm:$0xff]
  %v138 = vld [vmem:[%s1 + $0xe0] sm:$0xff]
  %v139 = vld [vmem:[%s1 + $0xe8] sm:$0xff]
  %v140 = vld [vmem:[%s1 + $0xf0] sm:$0xff]
  %v141 = vld [vmem:[%s1 + $0xf8] sm:$0xff]
  %v142 = vld [vmem:[%s1 + $0x100] sm:$0xff]
  %v143 = vld [vmem:[%s1 + $0x108] sm:$0xff]
  %v144 = vld [vmem:[%s1 + $0x110] sm:$0xff]
  %v145 = vld [vmem:[%s1 + $0x118] sm:$0xff]
  %v146 = vld [vmem:[%s1 + $0x120] sm:$0xff]
  %v147 = vld [vmem:[%s1 + $0x128] sm:$0xff]
  %v148 = vld [vmem:[%s1 + $0x130] sm:$0xff]
  %v149 = vld [vmem:[%s1 + $0x138] sm:$0xff]
  %v150 = vld [vmem:[%s1 + $0x140] sm:$0xff]
  %v151 = vld [vmem:[%s1 + $0x148] sm:$0xff]
  %v152 = vld [vmem:[%s1 + $0x150] sm:$0xff]
  %v153 = vld [vmem:[%s1 + $0x158] sm:$0xff]
  %v154 = vld [vmem:[%s1 + $0x160] sm:$0xff]
  %v155 = vld [vmem:[%s1 + $0x168] sm:$0xff]
  %v156 = vld [vmem:[%s1 + $0x170] sm:$0xff]
  %v157 = vld [vmem:[%s1 + $0x178] sm:$0xff]
  %v158 = vld [vmem:[%s1 + $0x180] sm:$0xff]
  %v159 = vld [vmem:[%s1 + $0x188] sm:$0xff]
  %v160 = vld [vmem:[%s1 + $0x190] sm:$0xff]
  %v161 = vld [vmem:[%s1 + $0x198] sm:$0xff]
  %v162 = vld [vmem:[%s1 + $0x1a0] sm:$0xff]
  %v163 = vld [vmem:[%s1 + $0x1a8] sm:$0xff]
  %v164 = vld [vmem:[%s1 + $0x1b0] sm:$0xff]
  %v165 = vld [vmem:[%s1 + $0x1b8] sm:$0xff]
  %v166 = vld [vmem:[%s1 + $0x1c0] sm:$0xff]
  %v167 = vld [vmem:[%s1 + $0x1c8] sm:$0xff]
  %v168 = vld [vmem:[%s1 + $0x1d0] sm:$0xff]
  %v169 = vld [vmem:[%s1 + $0x1d8] sm:$0xff]
  %v170 = vld [vmem:[%s1 + $0x1e0] sm:$0xff]
  %v171 = vld [vmem:[%s1 + $0x1e8] sm:$0xff]
  %v172 = vld [vmem:[%s1 + $0x1f0] sm:$0xff]
  %v173 = vld [vmem:[%s1 + $0x1f8] sm:$0xff]
  %v174 = vld [vmem:[%s1 + $0x200] sm:$0xff]
  %v175 = vld [vmem:[%s1 + $0x208] sm:$0xff]
  %v176 = vld [vmem:[%s1 + $0x210] sm:$0xff]
  %v177 = vld [vmem:[%s1 + $0x218] sm:$0xff]
  %v178 = vld [vmem:[%s1 + $0x220] sm:$0xff]
  %v179 = vld [vmem:[%s1 + $0x228] sm:$0xff]
  %v180 = vld [vmem:[%s1 + $0x230] sm:$0xff]
  %v181 = vld [vmem:[%s1 + $0x238] sm:$0xff]
  %v182 = vld [vmem:[%s1 + $0x240] sm:$0xff]
  %v183 = vld [vmem:[%s1 + $0x248] sm:$0xff]
  %v184 = vld [vmem:[%s1 + $0x250] sm:$0xff]
  %v185 = vld [vmem:[%s1 + $0x258] sm:$0xff]
  %v186 = vld [vmem:[%s1 + $0x260] sm:$0xff]
  %v187 = vld [vmem:[%s1 + $0x268] sm:$0xff]
  %v188 = vld [vmem:[%s1 + $0x270] sm:$0xff]
  %v189 = vld [vmem:[%s1 + $0x278] sm:$0xff]
  %v190 = vld [vmem:[%s1 + $0x280] sm:$0xff]
  %v191 = vld [vmem:[%s1 + $0x288] sm:$0xff]
  %v192 = vld [vmem:[%s1 + $0x290] sm:$0xff]
  %v193 = vld [vmem:[%s1 + $0x298] sm:$0xff]
  %v194 = vld [vmem:[%s1 + $0x2a0] sm:$0xff]
  %v195 = vld [vmem:[%s1 + $0x2a8] sm:$0xff]
  %v196 = vld [vmem:[%s1 + $0x2b0] sm:$0xff]
  %v197 = vld [vmem:[%s1 + $0x2b8] sm:$0xff]
  %v198 = vld [vmem:[%s1 + $0x2c0] sm:$0xff]
  %v199 = vld [vmem:[%s1 + $0x2c8] sm:$0xff]
  %v200 = vld [vmem:[%s1 + $0x2d0] sm:$0xff]
  %v201 = vld [vmem:[%s1 + $0x2d8] sm:$0xff]
  %v202 = vld [vmem:[%s1 + $0x2e0] sm:$0xff]
  %v203 = vld [vmem:[%s1 + $0x2e8] sm:$0xff]
  %v204 = vld [vmem:[%s1 + $0x2f0] sm:$0xff]
  %v205 = vld [vmem:[%s1 + $0x2f8] sm:$0xff]
  %v206 = vld [vmem:[%s2] sm:$0x1]
  %v208 = vperm.slane %v206, 0
  %210 = vmatpush.xpose.msra.mxu0 0.0
  %211 = vmatpush.xpose.msra.mxu0 0.0
  %212 = vmatpush.xpose.msra.mxu0 0.0
  %213 = vmatpush.xpose.msra.mxu0 0.0
  %214 = vmatpush.xpose.msra.mxu0 0.0
  %215 = vmatpush.xpose.msra.mxu0 0.0
  %216 = vmatpush.xpose.msra.mxu0 0.0
  %217 = vmatpush.xpose.msra.mxu0 0.0
  %218 = vmatpush.xpose.msra.mxu0 0.0
  %219 = vmatpush.xpose.msra.mxu0 0.0
  %220 = vmatpush.xpose.msra.mxu0 0.0
  %221 = vmatpush.xpose.msra.mxu0 0.0
  %222 = vmatpush.xpose.msra.mxu0 0.0
  %223 = vmatpush.xpose.msra.mxu0 0.0
  %224 = vmatpush.xpose.msra.mxu0 0.0
  %225 = vmatpush.xpose.msra.mxu0 %v110
  %226 = vmatmul.f32.gmra.mxu0 %v14
  %v227 = vpop.f32.mrf.mxu0
  %v228 = vadd.f32 %v208, %v227
  %229 = vdwg.mxu0
  %230 = vmatpush.xpose.msra.mxu0 0.0
  %231 = vmatpush.xpose.msra.mxu0 0.0
  %232 = vmatpush.xpose.msra.mxu0 0.0
  %233 = vmatpush.xpose.msra.mxu0 0.0
  %234 = vmatpush.xpose.msra.mxu0 0.0
  %235 = vmatpush.xpose.msra.mxu0 0.0
  %236 = vmatpush.xpose.msra.mxu0 0.0
  %237 = vmatpush.xpose.msra.mxu0 0.0
  %238 = vmatpush.xpose.msra.mxu0 0.0
  %239 = vmatpush.xpose.msra.mxu0 0.0
  %240 = vmatpush.xpose.msra.mxu0 0.0
  %241 = vmatpush.xpose.msra.mxu0 0.0
  %242 = vmatpush.xpose.msra.mxu0 0.0
  %243 = vmatpush.xpose.msra.mxu0 0.0
  %244 = vmatpush.xpose.msra.mxu0 0.0
  %245 = vmatpush.xpose.msra.mxu0 %v111
  %246 = vmatmul.f32.gmra.mxu0 %v15
  %v247 = vpop.f32.mrf.mxu0
  %v248 = vadd.f32 %v228, %v247
  %249 = vdwg.mxu0
  %250 = vmatpush.xpose.msra.mxu0 0.0
  %251 = vmatpush.xpose.msra.mxu0 0.0
  %252 = vmatpush.xpose.msra.mxu0 0.0
  %253 = vmatpush.xpose.msra.mxu0 0.0
  %254 = vmatpush.xpose.msra.mxu0 0.0
  %255 = vmatpush.xpose.msra.mxu0 0.0
  %256 = vmatpush.xpose.msra.mxu0 0.0
  %257 = vmatpush.xpose.msra.mxu0 0.0
  %258 = vmatpush.xpose.msra.mxu0 0.0
  %259 = vmatpush.xpose.msra.mxu0 0.0
  %260 = vmatpush.xpose.msra.mxu0 0.0
  %261 = vmatpush.xpose.msra.mxu0 0.0
  %262 = vmatpush.xpose.msra.mxu0 0.0
  %263 = vmatpush.xpose.msra.mxu0 0.0
  %264 = vmatpush.xpose.msra.mxu0 0.0
  %265 = vmatpush.xpose.msra.mxu0 %v112
  %266 = vmatmul.f32.gmra.mxu0 %v16
  %v267 = vpop.f32.mrf.mxu0
  %v268 = vadd.f32 %v248, %v267
  %269 = vdwg.mxu0
  %270 = vmatpush.xpose.msra.mxu0 0.0
  %271 = vmatpush.xpose.msra.mxu0 0.0
  %272 = vmatpush.xpose.msra.mxu0 0.0
  %273 = vmatpush.xpose.msra.mxu0 0.0
  %274 = vmatpush.xpose.msra.mxu0 0.0
  %275 = vmatpush.xpose.msra.mxu0 0.0
  %276 = vmatpush.xpose.msra.mxu0 0.0
  %277 = vmatpush.xpose.msra.mxu0 0.0
  %278 = vmatpush.xpose.msra.mxu0 0.0
  %279 = vmatpush.xpose.msra.mxu0 0.0
  %280 = vmatpush.xpose.msra.mxu0 0.0
  %281 = vmatpush.xpose.msra.mxu0 0.0
  %282 = vmatpush.xpose.msra.mxu0 0.0
  %283 = vmatpush.xpose.msra.mxu0 0.0
  %284 = vmatpush.xpose.msra.mxu0 0.0
  %285 = vmatpush.xpose.msra.mxu0 %v113
  %286 = vmatmul.f32.gmra.mxu0 %v17
  %v287 = vpop.f32.mrf.mxu0
  %v288 = vadd.f32 %v268, %v287
  %289 = vdwg.mxu0
  %290 = vmatpush.xpose.msra.mxu0 0.0
  %291 = vmatpush.xpose.msra.mxu0 0.0
  %292 = vmatpush.xpose.msra.mxu0 0.0
  %293 = vmatpush.xpose.msra.mxu0 0.0
  %294 = vmatpush.xpose.msra.mxu0 0.0
  %295 = vmatpush.xpose.msra.mxu0 0.0
  %296 = vmatpush.xpose.msra.mxu0 0.0
  %297 = vmatpush.xpose.msra.mxu0 0.0
  %298 = vmatpush.xpose.msra.mxu0 0.0
  %299 = vmatpush.xpose.msra.mxu0 0.0
  %300 = vmatpush.xpose.msra.mxu0 0.0
  %301 = vmatpush.xpose.msra.mxu0 0.0
  %302 = vmatpush.xpose.msra.mxu0 0.0
  %303 = vmatpush.xpose.msra.mxu0 0.0
  %304 = vmatpush.xpose.msra.mxu0 0.0
  %305 = vmatpush.xpose.msra.mxu0 %v114
  %306 = vmatmul.f32.gmra.mxu0 %v18
  %v307 = vpop.f32.mrf.mxu0
  %v308 = vadd.f32 %v288, %v307
  %309 = vdwg.mxu0
  %310 = vmatpush.xpose.msra.mxu0 0.0
  %311 = vmatpush.xpose.msra.mxu0 0.0
  %312 = vmatpush.xpose.msra.mxu0 0.0
  %313 = vmatpush.xpose.msra.mxu0 0.0
  %314 = vmatpush.xpose.msra.mxu0 0.0
  %315 = vmatpush.xpose.msra.mxu0 0.0
  %316 = vmatpush.xpose.msra.mxu0 0.0
  %317 = vmatpush.xpose.msra.mxu0 0.0
  %318 = vmatpush.xpose.msra.mxu0 0.0
  %319 = vmatpush.xpose.msra.mxu0 0.0
  %320 = vmatpush.xpose.msra.mxu0 0.0
  %321 = vmatpush.xpose.msra.mxu0 0.0
  %322 = vmatpush.xpose.msra.mxu0 0.0
  %323 = vmatpush.xpose.msra.mxu0 0.0
  %324 = vmatpush.xpose.msra.mxu0 0.0
  %325 = vmatpush.xpose.msra.mxu0 %v115
  %326 = vmatmul.f32.gmra.mxu0 %v19
  %v327 = vpop.f32.mrf.mxu0
  %v328 = vadd.f32 %v308, %v327
  %329 = vdwg.mxu0
  %330 = vmatpush.xpose.msra.mxu0 0.0
  %331 = vmatpush.xpose.msra.mxu0 0.0
  %332 = vmatpush.xpose.msra.mxu0 0.0
  %333 = vmatpush.xpose.msra.mxu0 0.0
  %334 = vmatpush.xpose.msra.mxu0 0.0
  %335 = vmatpush.xpose.msra.mxu0 0.0
  %336 = vmatpush.xpose.msra.mxu0 0.0
  %337 = vmatpush.xpose.msra.mxu0 0.0
  %338 = vmatpush.xpose.msra.mxu0 0.0
  %339 = vmatpush.xpose.msra.mxu0 0.0
  %340 = vmatpush.xpose.msra.mxu0 0.0
  %341 = vmatpush.xpose.msra.mxu0 0.0
  %342 = vmatpush.xpose.msra.mxu0 0.0
  %343 = vmatpush.xpose.msra.mxu0 0.0
  %344 = vmatpush.xpose.msra.mxu0 0.0
  %345 = vmatpush.xpose.msra.mxu0 %v116
  %346 = vmatmul.f32.gmra.mxu0 %v20
  %v347 = vpop.f32.mrf.mxu0
  %v348 = vadd.f32 %v328, %v347
  %349 = vdwg.mxu0
  %350 = vmatpush.xpose.msra.mxu0 0.0
  %351 = vmatpush.xpose.msra.mxu0 0.0
  %352 = vmatpush.xpose.msra.mxu0 0.0
  %353 = vmatpush.xpose.msra.mxu0 0.0
  %354 = vmatpush.xpose.msra.mxu0 0.0
  %355 = vmatpush.xpose.msra.mxu0 0.0
  %356 = vmatpush.xpose.msra.mxu0 0.0
  %357 = vmatpush.xpose.msra.mxu0 0.0
  %358 = vmatpush.xpose.msra.mxu0 0.0
  %359 = vmatpush.xpose.msra.mxu0 0.0
  %360 = vmatpush.xpose.msra.mxu0 0.0
  %361 = vmatpush.xpose.msra.mxu0 0.0
  %362 = vmatpush.xpose.msra.mxu0 0.0
  %363 = vmatpush.xpose.msra.mxu0 0.0
  %364 = vmatpush.xpose.msra.mxu0 0.0
  %365 = vmatpush.xpose.msra.mxu0 %v117
  %366 = vmatmul.f32.gmra.mxu0 %v21
  %v367 = vpop.f32.mrf.mxu0
  %v368 = vadd.f32 %v348, %v367
  %369 = vdwg.mxu0
  %370 = vmatpush.xpose.msra.mxu0 0.0
  %371 = vmatpush.xpose.msra.mxu0 0.0
  %372 = vmatpush.xpose.msra.mxu0 0.0
  %373 = vmatpush.xpose.msra.mxu0 0.0
  %374 = vmatpush.xpose.msra.mxu0 0.0
  %375 = vmatpush.xpose.msra.mxu0 0.0
  %376 = vmatpush.xpose.msra.mxu0 0.0
  %377 = vmatpush.xpose.msra.mxu0 0.0
  %378 = vmatpush.xpose.msra.mxu0 0.0
  %379 = vmatpush.xpose.msra.mxu0 0.0
  %380 = vmatpush.xpose.msra.mxu0 0.0
  %381 = vmatpush.xpose.msra.mxu0 0.0
  %382 = vmatpush.xpose.msra.mxu0 0.0
  %383 = vmatpush.xpose.msra.mxu0 0.0
  %384 = vmatpush.xpose.msra.mxu0 0.0
  %385 = vmatpush.xpose.msra.mxu0 %v118
  %386 = vmatmul.f32.gmra.mxu0 %v22
  %v387 = vpop.f32.mrf.mxu0
  %v388 = vadd.f32 %v368, %v387
  %389 = vdwg.mxu0
  %390 = vmatpush.xpose.msra.mxu0 0.0
  %391 = vmatpush.xpose.msra.mxu0 0.0
  %392 = vmatpush.xpose.msra.mxu0 0.0
  %393 = vmatpush.xpose.msra.mxu0 0.0
  %394 = vmatpush.xpose.msra.mxu0 0.0
  %395 = vmatpush.xpose.msra.mxu0 0.0
  %396 = vmatpush.xpose.msra.mxu0 0.0
  %397 = vmatpush.xpose.msra.mxu0 0.0
  %398 = vmatpush.xpose.msra.mxu0 0.0
  %399 = vmatpush.xpose.msra.mxu0 0.0
  %400 = vmatpush.xpose.msra.mxu0 0.0
  %401 = vmatpush.xpose.msra.mxu0 0.0
  %402 = vmatpush.xpose.msra.mxu0 0.0
  %403 = vmatpush.xpose.msra.mxu0 0.0
  %404 = vmatpush.xpose.msra.mxu0 0.0
  %405 = vmatpush.xpose.msra.mxu0 %v119
  %406 = vmatmul.f32.gmra.mxu0 %v23
  %v407 = vpop.f32.mrf.mxu0
  %v408 = vadd.f32 %v388, %v407
  %409 = vdwg.mxu0
  %410 = vmatpush.xpose.msra.mxu0 0.0
  %411 = vmatpush.xpose.msra.mxu0 0.0
  %412 = vmatpush.xpose.msra.mxu0 0.0
  %413 = vmatpush.xpose.msra.mxu0 0.0
  %414 = vmatpush.xpose.msra.mxu0 0.0
  %415 = vmatpush.xpose.msra.mxu0 0.0
  %416 = vmatpush.xpose.msra.mxu0 0.0
  %417 = vmatpush.xpose.msra.mxu0 0.0
  %418 = vmatpush.xpose.msra.mxu0 0.0
  %419 = vmatpush.xpose.msra.mxu0 0.0
  %420 = vmatpush.xpose.msra.mxu0 0.0
  %421 = vmatpush.xpose.msra.mxu0 0.0
  %422 = vmatpush.xpose.msra.mxu0 0.0
  %423 = vmatpush.xpose.msra.mxu0 0.0
  %424 = vmatpush.xpose.msra.mxu0 0.0
  %425 = vmatpush.xpose.msra.mxu0 %v120
  %426 = vmatmul.f32.gmra.mxu0 %v24
  %v427 = vpop.f32.mrf.mxu0
  %v428 = vadd.f32 %v408, %v427
  %429 = vdwg.mxu0
  %430 = vmatpush.xpose.msra.mxu0 0.0
  %431 = vmatpush.xpose.msra.mxu0 0.0
  %432 = vmatpush.xpose.msra.mxu0 0.0
  %433 = vmatpush.xpose.msra.mxu0 0.0
  %434 = vmatpush.xpose.msra.mxu0 0.0
  %435 = vmatpush.xpose.msra.mxu0 0.0
  %436 = vmatpush.xpose.msra.mxu0 0.0
  %437 = vmatpush.xpose.msra.mxu0 0.0
  %438 = vmatpush.xpose.msra.mxu0 0.0
  %439 = vmatpush.xpose.msra.mxu0 0.0
  %440 = vmatpush.xpose.msra.mxu0 0.0
  %441 = vmatpush.xpose.msra.mxu0 0.0
  %442 = vmatpush.xpose.msra.mxu0 0.0
  %443 = vmatpush.xpose.msra.mxu0 0.0
  %444 = vmatpush.xpose.msra.mxu0 0.0
  %445 = vmatpush.xpose.msra.mxu0 %v121
  %446 = vmatmul.f32.gmra.mxu0 %v25
  %v447 = vpop.f32.mrf.mxu0
  %v448 = vadd.f32 %v428, %v447
  %449 = vdwg.mxu0
  %450 = vmatpush.xpose.msra.mxu0 0.0
  %451 = vmatpush.xpose.msra.mxu0 0.0
  %452 = vmatpush.xpose.msra.mxu0 0.0
  %453 = vmatpush.xpose.msra.mxu0 0.0
  %454 = vmatpush.xpose.msra.mxu0 0.0
  %455 = vmatpush.xpose.msra.mxu0 0.0
  %456 = vmatpush.xpose.msra.mxu0 0.0
  %457 = vmatpush.xpose.msra.mxu0 0.0
  %458 = vmatpush.xpose.msra.mxu0 0.0
  %459 = vmatpush.xpose.msra.mxu0 0.0
  %460 = vmatpush.xpose.msra.mxu0 0.0
  %461 = vmatpush.xpose.msra.mxu0 0.0
  %462 = vmatpush.xpose.msra.mxu0 0.0
  %463 = vmatpush.xpose.msra.mxu0 0.0
  %464 = vmatpush.xpose.msra.mxu0 0.0
  %465 = vmatpush.xpose.msra.mxu0 %v122
  %466 = vmatmul.f32.gmra.mxu0 %v26
  %v467 = vpop.f32.mrf.mxu0
  %v468 = vadd.f32 %v448, %v467
  %469 = vdwg.mxu0
  %470 = vmatpush.xpose.msra.mxu0 0.0
  %471 = vmatpush.xpose.msra.mxu0 0.0
  %472 = vmatpush.xpose.msra.mxu0 0.0
  %473 = vmatpush.xpose.msra.mxu0 0.0
  %474 = vmatpush.xpose.msra.mxu0 0.0
  %475 = vmatpush.xpose.msra.mxu0 0.0
  %476 = vmatpush.xpose.msra.mxu0 0.0
  %477 = vmatpush.xpose.msra.mxu0 0.0
  %478 = vmatpush.xpose.msra.mxu0 0.0
  %479 = vmatpush.xpose.msra.mxu0 0.0
  %480 = vmatpush.xpose.msra.mxu0 0.0
  %481 = vmatpush.xpose.msra.mxu0 0.0
  %482 = vmatpush.xpose.msra.mxu0 0.0
  %483 = vmatpush.xpose.msra.mxu0 0.0
  %484 = vmatpush.xpose.msra.mxu0 0.0
  %485 = vmatpush.xpose.msra.mxu0 %v123
  %486 = vmatmul.f32.gmra.mxu0 %v27
  %v487 = vpop.f32.mrf.mxu0
  %v488 = vadd.f32 %v468, %v487
  %489 = vdwg.mxu0
  %490 = vmatpush.xpose.msra.mxu0 0.0
  %491 = vmatpush.xpose.msra.mxu0 0.0
  %492 = vmatpush.xpose.msra.mxu0 0.0
  %493 = vmatpush.xpose.msra.mxu0 0.0
  %494 = vmatpush.xpose.msra.mxu0 0.0
  %495 = vmatpush.xpose.msra.mxu0 0.0
  %496 = vmatpush.xpose.msra.mxu0 0.0
  %497 = vmatpush.xpose.msra.mxu0 0.0
  %498 = vmatpush.xpose.msra.mxu0 0.0
  %499 = vmatpush.xpose.msra.mxu0 0.0
  %500 = vmatpush.xpose.msra.mxu0 0.0
  %501 = vmatpush.xpose.msra.mxu0 0.0
  %502 = vmatpush.xpose.msra.mxu0 0.0
  %503 = vmatpush.xpose.msra.mxu0 0.0
  %504 = vmatpush.xpose.msra.mxu0 0.0
  %505 = vmatpush.xpose.msra.mxu0 %v124
  %506 = vmatmul.f32.gmra.mxu0 %v28
  %v507 = vpop.f32.mrf.mxu0
  %v508 = vadd.f32 %v488, %v507
  %509 = vdwg.mxu0
  %510 = vmatpush.xpose.msra.mxu0 0.0
  %511 = vmatpush.xpose.msra.mxu0 0.0
  %512 = vmatpush.xpose.msra.mxu0 0.0
  %513 = vmatpush.xpose.msra.mxu0 0.0
  %514 = vmatpush.xpose.msra.mxu0 0.0
  %515 = vmatpush.xpose.msra.mxu0 0.0
  %516 = vmatpush.xpose.msra.mxu0 0.0
  %517 = vmatpush.xpose.msra.mxu0 0.0
  %518 = vmatpush.xpose.msra.mxu0 0.0
  %519 = vmatpush.xpose.msra.mxu0 0.0
  %520 = vmatpush.xpose.msra.mxu0 0.0
  %521 = vmatpush.xpose.msra.mxu0 0.0
  %522 = vmatpush.xpose.msra.mxu0 0.0
  %523 = vmatpush.xpose.msra.mxu0 0.0
  %524 = vmatpush.xpose.msra.mxu0 0.0
  %525 = vmatpush.xpose.msra.mxu0 %v125
  %526 = vmatmul.f32.gmra.mxu0 %v29
  %v527 = vpop.f32.mrf.mxu0
  %v528 = vadd.f32 %v508, %v527
  %529 = vdwg.mxu0
  %530 = vmatpush.xpose.msra.mxu0 0.0
  %531 = vmatpush.xpose.msra.mxu0 0.0
  %532 = vmatpush.xpose.msra.mxu0 0.0
  %533 = vmatpush.xpose.msra.mxu0 0.0
  %534 = vmatpush.xpose.msra.mxu0 0.0
  %535 = vmatpush.xpose.msra.mxu0 0.0
  %536 = vmatpush.xpose.msra.mxu0 0.0
  %537 = vmatpush.xpose.msra.mxu0 0.0
  %538 = vmatpush.xpose.msra.mxu0 0.0
  %539 = vmatpush.xpose.msra.mxu0 0.0
  %540 = vmatpush.xpose.msra.mxu0 0.0
  %541 = vmatpush.xpose.msra.mxu0 0.0
  %542 = vmatpush.xpose.msra.mxu0 0.0
  %543 = vmatpush.xpose.msra.mxu0 0.0
  %544 = vmatpush.xpose.msra.mxu0 0.0
  %545 = vmatpush.xpose.msra.mxu0 %v126
  %546 = vmatmul.f32.gmra.mxu0 %v30
  %v547 = vpop.f32.mrf.mxu0
  %v548 = vadd.f32 %v528, %v547
  %549 = vdwg.mxu0
  %550 = vmatpush.xpose.msra.mxu0 0.0
  %551 = vmatpush.xpose.msra.mxu0 0.0
  %552 = vmatpush.xpose.msra.mxu0 0.0
  %553 = vmatpush.xpose.msra.mxu0 0.0
  %554 = vmatpush.xpose.msra.mxu0 0.0
  %555 = vmatpush.xpose.msra.mxu0 0.0
  %556 = vmatpush.xpose.msra.mxu0 0.0
  %557 = vmatpush.xpose.msra.mxu0 0.0
  %558 = vmatpush.xpose.msra.mxu0 0.0
  %559 = vmatpush.xpose.msra.mxu0 0.0
  %560 = vmatpush.xpose.msra.mxu0 0.0
  %561 = vmatpush.xpose.msra.mxu0 0.0
  %562 = vmatpush.xpose.msra.mxu0 0.0
  %563 = vmatpush.xpose.msra.mxu0 0.0
  %564 = vmatpush.xpose.msra.mxu0 0.0
  %565 = vmatpush.xpose.msra.mxu0 %v127
  %566 = vmatmul.f32.gmra.mxu0 %v31
  %v567 = vpop.f32.mrf.mxu0
  %v568 = vadd.f32 %v548, %v567
  %569 = vdwg.mxu0
  %570 = vmatpush.xpose.msra.mxu0 0.0
  %571 = vmatpush.xpose.msra.mxu0 0.0
  %572 = vmatpush.xpose.msra.mxu0 0.0
  %573 = vmatpush.xpose.msra.mxu0 0.0
  %574 = vmatpush.xpose.msra.mxu0 0.0
  %575 = vmatpush.xpose.msra.mxu0 0.0
  %576 = vmatpush.xpose.msra.mxu0 0.0
  %577 = vmatpush.xpose.msra.mxu0 0.0
  %578 = vmatpush.xpose.msra.mxu0 0.0
  %579 = vmatpush.xpose.msra.mxu0 0.0
  %580 = vmatpush.xpose.msra.mxu0 0.0
  %581 = vmatpush.xpose.msra.mxu0 0.0
  %582 = vmatpush.xpose.msra.mxu0 0.0
  %583 = vmatpush.xpose.msra.mxu0 0.0
  %584 = vmatpush.xpose.msra.mxu0 0.0
  %585 = vmatpush.xpose.msra.mxu0 %v128
  %586 = vmatmul.f32.gmra.mxu0 %v32
  %v587 = vpop.f32.mrf.mxu0
  %v588 = vadd.f32 %v568, %v587
  %589 = vdwg.mxu0
  %590 = vmatpush.xpose.msra.mxu0 0.0
  %591 = vmatpush.xpose.msra.mxu0 0.0
  %592 = vmatpush.xpose.msra.mxu0 0.0
  %593 = vmatpush.xpose.msra.mxu0 0.0
  %594 = vmatpush.xpose.msra.mxu0 0.0
  %595 = vmatpush.xpose.msra.mxu0 0.0
  %596 = vmatpush.xpose.msra.mxu0 0.0
  %597 = vmatpush.xpose.msra.mxu0 0.0
  %598 = vmatpush.xpose.msra.mxu0 0.0
  %599 = vmatpush.xpose.msra.mxu0 0.0
  %600 = vmatpush.xpose.msra.mxu0 0.0
  %601 = vmatpush.xpose.msra.mxu0 0.0
  %602 = vmatpush.xpose.msra.mxu0 0.0
  %603 = vmatpush.xpose.msra.mxu0 0.0
  %604 = vmatpush.xpose.msra.mxu0 0.0
  %605 = vmatpush.xpose.msra.mxu0 %v129
  %606 = vmatmul.f32.gmra.mxu0 %v33
  %v607 = vpop.f32.mrf.mxu0
  %v608 = vadd.f32 %v588, %v607
  %609 = vdwg.mxu0
  %610 = vmatpush.xpose.msra.mxu0 0.0
  %611 = vmatpush.xpose.msra.mxu0 0.0
  %612 = vmatpush.xpose.msra.mxu0 0.0
  %613 = vmatpush.xpose.msra.mxu0 0.0
  %614 = vmatpush.xpose.msra.mxu0 0.0
  %615 = vmatpush.xpose.msra.mxu0 0.0
  %616 = vmatpush.xpose.msra.mxu0 0.0
  %617 = vmatpush.xpose.msra.mxu0 0.0
  %618 = vmatpush.xpose.msra.mxu0 0.0
  %619 = vmatpush.xpose.msra.mxu0 0.0
  %620 = vmatpush.xpose.msra.mxu0 0.0
  %621 = vmatpush.xpose.msra.mxu0 0.0
  %622 = vmatpush.xpose.msra.mxu0 0.0
  %623 = vmatpush.xpose.msra.mxu0 0.0
  %624 = vmatpush.xpose.msra.mxu0 0.0
  %625 = vmatpush.xpose.msra.mxu0 %v130
  %626 = vmatmul.f32.gmra.mxu0 %v34
  %v627 = vpop.f32.mrf.mxu0
  %v628 = vadd.f32 %v608, %v627
  %629 = vdwg.mxu0
  %630 = vmatpush.xpose.msra.mxu0 0.0
  %631 = vmatpush.xpose.msra.mxu0 0.0
  %632 = vmatpush.xpose.msra.mxu0 0.0
  %633 = vmatpush.xpose.msra.mxu0 0.0
  %634 = vmatpush.xpose.msra.mxu0 0.0
  %635 = vmatpush.xpose.msra.mxu0 0.0
  %636 = vmatpush.xpose.msra.mxu0 0.0
  %637 = vmatpush.xpose.msra.mxu0 0.0
  %638 = vmatpush.xpose.msra.mxu0 0.0
  %639 = vmatpush.xpose.msra.mxu0 0.0
  %640 = vmatpush.xpose.msra.mxu0 0.0
  %641 = vmatpush.xpose.msra.mxu0 0.0
  %642 = vmatpush.xpose.msra.mxu0 0.0
  %643 = vmatpush.xpose.msra.mxu0 0.0
  %644 = vmatpush.xpose.msra.mxu0 0.0
  %645 = vmatpush.xpose.msra.mxu0 %v131
  %646 = vmatmul.f32.gmra.mxu0 %v35
  %v647 = vpop.f32.mrf.mxu0
  %v648 = vadd.f32 %v628, %v647
  %649 = vdwg.mxu0
  %650 = vmatpush.xpose.msra.mxu0 0.0
  %651 = vmatpush.xpose.msra.mxu0 0.0
  %652 = vmatpush.xpose.msra.mxu0 0.0
  %653 = vmatpush.xpose.msra.mxu0 0.0
  %654 = vmatpush.xpose.msra.mxu0 0.0
  %655 = vmatpush.xpose.msra.mxu0 0.0
  %656 = vmatpush.xpose.msra.mxu0 0.0
  %657 = vmatpush.xpose.msra.mxu0 0.0
  %658 = vmatpush.xpose.msra.mxu0 0.0
  %659 = vmatpush.xpose.msra.mxu0 0.0
  %660 = vmatpush.xpose.msra.mxu0 0.0
  %661 = vmatpush.xpose.msra.mxu0 0.0
  %662 = vmatpush.xpose.msra.mxu0 0.0
  %663 = vmatpush.xpose.msra.mxu0 0.0
  %664 = vmatpush.xpose.msra.mxu0 0.0
  %665 = vmatpush.xpose.msra.mxu0 %v132
  %666 = vmatmul.f32.gmra.mxu0 %v36
  %v667 = vpop.f32.mrf.mxu0
  %v668 = vadd.f32 %v648, %v667
  %669 = vdwg.mxu0
  %670 = vmatpush.xpose.msra.mxu0 0.0
  %671 = vmatpush.xpose.msra.mxu0 0.0
  %672 = vmatpush.xpose.msra.mxu0 0.0
  %673 = vmatpush.xpose.msra.mxu0 0.0
  %674 = vmatpush.xpose.msra.mxu0 0.0
  %675 = vmatpush.xpose.msra.mxu0 0.0
  %676 = vmatpush.xpose.msra.mxu0 0.0
  %677 = vmatpush.xpose.msra.mxu0 0.0
  %678 = vmatpush.xpose.msra.mxu0 0.0
  %679 = vmatpush.xpose.msra.mxu0 0.0
  %680 = vmatpush.xpose.msra.mxu0 0.0
  %681 = vmatpush.xpose.msra.mxu0 0.0
  %682 = vmatpush.xpose.msra.mxu0 0.0
  %683 = vmatpush.xpose.msra.mxu0 0.0
  %684 = vmatpush.xpose.msra.mxu0 0.0
  %685 = vmatpush.xpose.msra.mxu0 %v133
  %686 = vmatmul.f32.gmra.mxu0 %v37
  %v687 = vpop.f32.mrf.mxu0
  %v688 = vadd.f32 %v668, %v687
  %689 = vdwg.mxu0
  %690 = vmatpush.xpose.msra.mxu0 0.0
  %691 = vmatpush.xpose.msra.mxu0 0.0
  %692 = vmatpush.xpose.msra.mxu0 0.0
  %693 = vmatpush.xpose.msra.mxu0 0.0
  %694 = vmatpush.xpose.msra.mxu0 0.0
  %695 = vmatpush.xpose.msra.mxu0 0.0
  %696 = vmatpush.xpose.msra.mxu0 0.0
  %697 = vmatpush.xpose.msra.mxu0 0.0
  %698 = vmatpush.xpose.msra.mxu0 0.0
  %699 = vmatpush.xpose.msra.mxu0 0.0
  %700 = vmatpush.xpose.msra.mxu0 0.0
  %701 = vmatpush.xpose.msra.mxu0 0.0
  %702 = vmatpush.xpose.msra.mxu0 0.0
  %703 = vmatpush.xpose.msra.mxu0 0.0
  %704 = vmatpush.xpose.msra.mxu0 0.0
  %705 = vmatpush.xpose.msra.mxu0 %v134
  %706 = vmatmul.f32.gmra.mxu0 %v38
  %v707 = vpop.f32.mrf.mxu0
  %v708 = vadd.f32 %v688, %v707
  %709 = vdwg.mxu0
  %710 = vmatpush.xpose.msra.mxu0 0.0
  %711 = vmatpush.xpose.msra.mxu0 0.0
  %712 = vmatpush.xpose.msra.mxu0 0.0
  %713 = vmatpush.xpose.msra.mxu0 0.0
  %714 = vmatpush.xpose.msra.mxu0 0.0
  %715 = vmatpush.xpose.msra.mxu0 0.0
  %716 = vmatpush.xpose.msra.mxu0 0.0
  %717 = vmatpush.xpose.msra.mxu0 0.0
  %718 = vmatpush.xpose.msra.mxu0 0.0
  %719 = vmatpush.xpose.msra.mxu0 0.0
  %720 = vmatpush.xpose.msra.mxu0 0.0
  %721 = vmatpush.xpose.msra.mxu0 0.0
  %722 = vmatpush.xpose.msra.mxu0 0.0
  %723 = vmatpush.xpose.msra.mxu0 0.0
  %724 = vmatpush.xpose.msra.mxu0 0.0
  %725 = vmatpush.xpose.msra.mxu0 %v135
  %726 = vmatmul.f32.gmra.mxu0 %v39
  %v727 = vpop.f32.mrf.mxu0
  %v728 = vadd.f32 %v708, %v727
  %729 = vdwg.mxu0
  %730 = vmatpush.xpose.msra.mxu0 0.0
  %731 = vmatpush.xpose.msra.mxu0 0.0
  %732 = vmatpush.xpose.msra.mxu0 0.0
  %733 = vmatpush.xpose.msra.mxu0 0.0
  %734 = vmatpush.xpose.msra.mxu0 0.0
  %735 = vmatpush.xpose.msra.mxu0 0.0
  %736 = vmatpush.xpose.msra.mxu0 0.0
  %737 = vmatpush.xpose.msra.mxu0 0.0
  %738 = vmatpush.xpose.msra.mxu0 0.0
  %739 = vmatpush.xpose.msra.mxu0 0.0
  %740 = vmatpush.xpose.msra.mxu0 0.0
  %741 = vmatpush.xpose.msra.mxu0 0.0
  %742 = vmatpush.xpose.msra.mxu0 0.0
  %743 = vmatpush.xpose.msra.mxu0 0.0
  %744 = vmatpush.xpose.msra.mxu0 0.0
  %745 = vmatpush.xpose.msra.mxu0 %v136
  %746 = vmatmul.f32.gmra.mxu0 %v40
  %v747 = vpop.f32.mrf.mxu0
  %v748 = vadd.f32 %v728, %v747
  %749 = vdwg.mxu0
  %750 = vmatpush.xpose.msra.mxu0 0.0
  %751 = vmatpush.xpose.msra.mxu0 0.0
  %752 = vmatpush.xpose.msra.mxu0 0.0
  %753 = vmatpush.xpose.msra.mxu0 0.0
  %754 = vmatpush.xpose.msra.mxu0 0.0
  %755 = vmatpush.xpose.msra.mxu0 0.0
  %756 = vmatpush.xpose.msra.mxu0 0.0
  %757 = vmatpush.xpose.msra.mxu0 0.0
  %758 = vmatpush.xpose.msra.mxu0 0.0
  %759 = vmatpush.xpose.msra.mxu0 0.0
  %760 = vmatpush.xpose.msra.mxu0 0.0
  %761 = vmatpush.xpose.msra.mxu0 0.0
  %762 = vmatpush.xpose.msra.mxu0 0.0
  %763 = vmatpush.xpose.msra.mxu0 0.0
  %764 = vmatpush.xpose.msra.mxu0 0.0
  %765 = vmatpush.xpose.msra.mxu0 %v137
  %766 = vmatmul.f32.gmra.mxu0 %v41
  %v767 = vpop.f32.mrf.mxu0
  %v768 = vadd.f32 %v748, %v767
  %769 = vdwg.mxu0
  %770 = vmatpush.xpose.msra.mxu0 0.0
  %771 = vmatpush.xpose.msra.mxu0 0.0
  %772 = vmatpush.xpose.msra.mxu0 0.0
  %773 = vmatpush.xpose.msra.mxu0 0.0
  %774 = vmatpush.xpose.msra.mxu0 0.0
  %775 = vmatpush.xpose.msra.mxu0 0.0
  %776 = vmatpush.xpose.msra.mxu0 0.0
  %777 = vmatpush.xpose.msra.mxu0 0.0
  %778 = vmatpush.xpose.msra.mxu0 0.0
  %779 = vmatpush.xpose.msra.mxu0 0.0
  %780 = vmatpush.xpose.msra.mxu0 0.0
  %781 = vmatpush.xpose.msra.mxu0 0.0
  %782 = vmatpush.xpose.msra.mxu0 0.0
  %783 = vmatpush.xpose.msra.mxu0 0.0
  %784 = vmatpush.xpose.msra.mxu0 0.0
  %785 = vmatpush.xpose.msra.mxu0 %v138
  %786 = vmatmul.f32.gmra.mxu0 %v42
  %v787 = vpop.f32.mrf.mxu0
  %v788 = vadd.f32 %v768, %v787
  %789 = vdwg.mxu0
  %790 = vmatpush.xpose.msra.mxu0 0.0
  %791 = vmatpush.xpose.msra.mxu0 0.0
  %792 = vmatpush.xpose.msra.mxu0 0.0
  %793 = vmatpush.xpose.msra.mxu0 0.0
  %794 = vmatpush.xpose.msra.mxu0 0.0
  %795 = vmatpush.xpose.msra.mxu0 0.0
  %796 = vmatpush.xpose.msra.mxu0 0.0
  %797 = vmatpush.xpose.msra.mxu0 0.0
  %798 = vmatpush.xpose.msra.mxu0 0.0
  %799 = vmatpush.xpose.msra.mxu0 0.0
  %800 = vmatpush.xpose.msra.mxu0 0.0
  %801 = vmatpush.xpose.msra.mxu0 0.0
  %802 = vmatpush.xpose.msra.mxu0 0.0
  %803 = vmatpush.xpose.msra.mxu0 0.0
  %804 = vmatpush.xpose.msra.mxu0 0.0
  %805 = vmatpush.xpose.msra.mxu0 %v139
  %806 = vmatmul.f32.gmra.mxu0 %v43
  %v807 = vpop.f32.mrf.mxu0
  %v808 = vadd.f32 %v788, %v807
  %809 = vdwg.mxu0
  %810 = vmatpush.xpose.msra.mxu0 0.0
  %811 = vmatpush.xpose.msra.mxu0 0.0
  %812 = vmatpush.xpose.msra.mxu0 0.0
  %813 = vmatpush.xpose.msra.mxu0 0.0
  %814 = vmatpush.xpose.msra.mxu0 0.0
  %815 = vmatpush.xpose.msra.mxu0 0.0
  %816 = vmatpush.xpose.msra.mxu0 0.0
  %817 = vmatpush.xpose.msra.mxu0 0.0
  %818 = vmatpush.xpose.msra.mxu0 0.0
  %819 = vmatpush.xpose.msra.mxu0 0.0
  %820 = vmatpush.xpose.msra.mxu0 0.0
  %821 = vmatpush.xpose.msra.mxu0 0.0
  %822 = vmatpush.xpose.msra.mxu0 0.0
  %823 = vmatpush.xpose.msra.mxu0 0.0
  %824 = vmatpush.xpose.msra.mxu0 0.0
  %825 = vmatpush.xpose.msra.mxu0 %v140
  %826 = vmatmul.f32.gmra.mxu0 %v44
  %v827 = vpop.f32.mrf.mxu0
  %v828 = vadd.f32 %v808, %v827
  %829 = vdwg.mxu0
  %830 = vmatpush.xpose.msra.mxu0 0.0
  %831 = vmatpush.xpose.msra.mxu0 0.0
  %832 = vmatpush.xpose.msra.mxu0 0.0
  %833 = vmatpush.xpose.msra.mxu0 0.0
  %834 = vmatpush.xpose.msra.mxu0 0.0
  %835 = vmatpush.xpose.msra.mxu0 0.0
  %836 = vmatpush.xpose.msra.mxu0 0.0
  %837 = vmatpush.xpose.msra.mxu0 0.0
  %838 = vmatpush.xpose.msra.mxu0 0.0
  %839 = vmatpush.xpose.msra.mxu0 0.0
  %840 = vmatpush.xpose.msra.mxu0 0.0
  %841 = vmatpush.xpose.msra.mxu0 0.0
  %842 = vmatpush.xpose.msra.mxu0 0.0
  %843 = vmatpush.xpose.msra.mxu0 0.0
  %844 = vmatpush.xpose.msra.mxu0 0.0
  %845 = vmatpush.xpose.msra.mxu0 %v141
  %846 = vmatmul.f32.gmra.mxu0 %v45
  %v847 = vpop.f32.mrf.mxu0
  %v848 = vadd.f32 %v828, %v847
  %849 = vdwg.mxu0
  %850 = vmatpush.xpose.msra.mxu0 0.0
  %851 = vmatpush.xpose.msra.mxu0 0.0
  %852 = vmatpush.xpose.msra.mxu0 0.0
  %853 = vmatpush.xpose.msra.mxu0 0.0
  %854 = vmatpush.xpose.msra.mxu0 0.0
  %855 = vmatpush.xpose.msra.mxu0 0.0
  %856 = vmatpush.xpose.msra.mxu0 0.0
  %857 = vmatpush.xpose.msra.mxu0 0.0
  %858 = vmatpush.xpose.msra.mxu0 0.0
  %859 = vmatpush.xpose.msra.mxu0 0.0
  %860 = vmatpush.xpose.msra.mxu0 0.0
  %861 = vmatpush.xpose.msra.mxu0 0.0
  %862 = vmatpush.xpose.msra.mxu0 0.0
  %863 = vmatpush.xpose.msra.mxu0 0.0
  %864 = vmatpush.xpose.msra.mxu0 0.0
  %865 = vmatpush.xpose.msra.mxu0 %v142
  %866 = vmatmul.f32.gmra.mxu0 %v46
  %v867 = vpop.f32.mrf.mxu0
  %v868 = vadd.f32 %v848, %v867
  %869 = vdwg.mxu0
  %870 = vmatpush.xpose.msra.mxu0 0.0
  %871 = vmatpush.xpose.msra.mxu0 0.0
  %872 = vmatpush.xpose.msra.mxu0 0.0
  %873 = vmatpush.xpose.msra.mxu0 0.0
  %874 = vmatpush.xpose.msra.mxu0 0.0
  %875 = vmatpush.xpose.msra.mxu0 0.0
  %876 = vmatpush.xpose.msra.mxu0 0.0
  %877 = vmatpush.xpose.msra.mxu0 0.0
  %878 = vmatpush.xpose.msra.mxu0 0.0
  %879 = vmatpush.xpose.msra.mxu0 0.0
  %880 = vmatpush.xpose.msra.mxu0 0.0
  %881 = vmatpush.xpose.msra.mxu0 0.0
  %882 = vmatpush.xpose.msra.mxu0 0.0
  %883 = vmatpush.xpose.msra.mxu0 0.0
  %884 = vmatpush.xpose.msra.mxu0 0.0
  %885 = vmatpush.xpose.msra.mxu0 %v143
  %886 = vmatmul.f32.gmra.mxu0 %v47
  %v887 = vpop.f32.mrf.mxu0
  %v888 = vadd.f32 %v868, %v887
  %889 = vdwg.mxu0
  %890 = vmatpush.xpose.msra.mxu0 0.0
  %891 = vmatpush.xpose.msra.mxu0 0.0
  %892 = vmatpush.xpose.msra.mxu0 0.0
  %893 = vmatpush.xpose.msra.mxu0 0.0
  %894 = vmatpush.xpose.msra.mxu0 0.0
  %895 = vmatpush.xpose.msra.mxu0 0.0
  %896 = vmatpush.xpose.msra.mxu0 0.0
  %897 = vmatpush.xpose.msra.mxu0 0.0
  %898 = vmatpush.xpose.msra.mxu0 0.0
  %899 = vmatpush.xpose.msra.mxu0 0.0
  %900 = vmatpush.xpose.msra.mxu0 0.0
  %901 = vmatpush.xpose.msra.mxu0 0.0
  %902 = vmatpush.xpose.msra.mxu0 0.0
  %903 = vmatpush.xpose.msra.mxu0 0.0
  %904 = vmatpush.xpose.msra.mxu0 0.0
  %905 = vmatpush.xpose.msra.mxu0 %v144
  %906 = vmatmul.f32.gmra.mxu0 %v48
  %v907 = vpop.f32.mrf.mxu0
  %v908 = vadd.f32 %v888, %v907
  %909 = vdwg.mxu0
  %910 = vmatpush.xpose.msra.mxu0 0.0
  %911 = vmatpush.xpose.msra.mxu0 0.0
  %912 = vmatpush.xpose.msra.mxu0 0.0
  %913 = vmatpush.xpose.msra.mxu0 0.0
  %914 = vmatpush.xpose.msra.mxu0 0.0
  %915 = vmatpush.xpose.msra.mxu0 0.0
  %916 = vmatpush.xpose.msra.mxu0 0.0
  %917 = vmatpush.xpose.msra.mxu0 0.0
  %918 = vmatpush.xpose.msra.mxu0 0.0
  %919 = vmatpush.xpose.msra.mxu0 0.0
  %920 = vmatpush.xpose.msra.mxu0 0.0
  %921 = vmatpush.xpose.msra.mxu0 0.0
  %922 = vmatpush.xpose.msra.mxu0 0.0
  %923 = vmatpush.xpose.msra.mxu0 0.0
  %924 = vmatpush.xpose.msra.mxu0 0.0
  %925 = vmatpush.xpose.msra.mxu0 %v145
  %926 = vmatmul.f32.gmra.mxu0 %v49
  %v927 = vpop.f32.mrf.mxu0
  %v928 = vadd.f32 %v908, %v927
  %929 = vdwg.mxu0
  %930 = vmatpush.xpose.msra.mxu0 0.0
  %931 = vmatpush.xpose.msra.mxu0 0.0
  %932 = vmatpush.xpose.msra.mxu0 0.0
  %933 = vmatpush.xpose.msra.mxu0 0.0
  %934 = vmatpush.xpose.msra.mxu0 0.0
  %935 = vmatpush.xpose.msra.mxu0 0.0
  %936 = vmatpush.xpose.msra.mxu0 0.0
  %937 = vmatpush.xpose.msra.mxu0 0.0
  %938 = vmatpush.xpose.msra.mxu0 0.0
  %939 = vmatpush.xpose.msra.mxu0 0.0
  %940 = vmatpush.xpose.msra.mxu0 0.0
  %941 = vmatpush.xpose.msra.mxu0 0.0
  %942 = vmatpush.xpose.msra.mxu0 0.0
  %943 = vmatpush.xpose.msra.mxu0 0.0
  %944 = vmatpush.xpose.msra.mxu0 0.0
  %945 = vmatpush.xpose.msra.mxu0 %v146
  %946 = vmatmul.f32.gmra.mxu0 %v50
  %v947 = vpop.f32.mrf.mxu0
  %v948 = vadd.f32 %v928, %v947
  %949 = vdwg.mxu0
  %950 = vmatpush.xpose.msra.mxu0 0.0
  %951 = vmatpush.xpose.msra.mxu0 0.0
  %952 = vmatpush.xpose.msra.mxu0 0.0
  %953 = vmatpush.xpose.msra.mxu0 0.0
  %954 = vmatpush.xpose.msra.mxu0 0.0
  %955 = vmatpush.xpose.msra.mxu0 0.0
  %956 = vmatpush.xpose.msra.mxu0 0.0
  %957 = vmatpush.xpose.msra.mxu0 0.0
  %958 = vmatpush.xpose.msra.mxu0 0.0
  %959 = vmatpush.xpose.msra.mxu0 0.0
  %960 = vmatpush.xpose.msra.mxu0 0.0
  %961 = vmatpush.xpose.msra.mxu0 0.0
  %962 = vmatpush.xpose.msra.mxu0 0.0
  %963 = vmatpush.xpose.msra.mxu0 0.0
  %964 = vmatpush.xpose.msra.mxu0 0.0
  %965 = vmatpush.xpose.msra.mxu0 %v147
  %966 = vmatmul.f32.gmra.mxu0 %v51
  %v967 = vpop.f32.mrf.mxu0
  %v968 = vadd.f32 %v948, %v967
  %969 = vdwg.mxu0
  %970 = vmatpush.xpose.msra.mxu0 0.0
  %971 = vmatpush.xpose.msra.mxu0 0.0
  %972 = vmatpush.xpose.msra.mxu0 0.0
  %973 = vmatpush.xpose.msra.mxu0 0.0
  %974 = vmatpush.xpose.msra.mxu0 0.0
  %975 = vmatpush.xpose.msra.mxu0 0.0
  %976 = vmatpush.xpose.msra.mxu0 0.0
  %977 = vmatpush.xpose.msra.mxu0 0.0
  %978 = vmatpush.xpose.msra.mxu0 0.0
  %979 = vmatpush.xpose.msra.mxu0 0.0
  %980 = vmatpush.xpose.msra.mxu0 0.0
  %981 = vmatpush.xpose.msra.mxu0 0.0
  %982 = vmatpush.xpose.msra.mxu0 0.0
  %983 = vmatpush.xpose.msra.mxu0 0.0
  %984 = vmatpush.xpose.msra.mxu0 0.0
  %985 = vmatpush.xpose.msra.mxu0 %v148
  %986 = vmatmul.f32.gmra.mxu0 %v52
  %v987 = vpop.f32.mrf.mxu0
  %v988 = vadd.f32 %v968, %v987
  %989 = vdwg.mxu0
  %990 = vmatpush.xpose.msra.mxu0 0.0
  %991 = vmatpush.xpose.msra.mxu0 0.0
  %992 = vmatpush.xpose.msra.mxu0 0.0
  %993 = vmatpush.xpose.msra.mxu0 0.0
  %994 = vmatpush.xpose.msra.mxu0 0.0
  %995 = vmatpush.xpose.msra.mxu0 0.0
  %996 = vmatpush.xpose.msra.mxu0 0.0
  %997 = vmatpush.xpose.msra.mxu0 0.0
  %998 = vmatpush.xpose.msra.mxu0 0.0
  %999 = vmatpush.xpose.msra.mxu0 0.0
  %1000 = vmatpush.xpose.msra.mxu0 0.0
  %1001 = vmatpush.xpose.msra.mxu0 0.0
  %1002 = vmatpush.xpose.msra.mxu0 0.0
  %1003 = vmatpush.xpose.msra.mxu0 0.0
  %1004 = vmatpush.xpose.msra.mxu0 0.0
  %1005 = vmatpush.xpose.msra.mxu0 %v149
  %1006 = vmatmul.f32.gmra.mxu0 %v53
  %v1007 = vpop.f32.mrf.mxu0
  %v1008 = vadd.f32 %v988, %v1007
  %1009 = vdwg.mxu0
  %1010 = vmatpush.xpose.msra.mxu0 0.0
  %1011 = vmatpush.xpose.msra.mxu0 0.0
  %1012 = vmatpush.xpose.msra.mxu0 0.0
  %1013 = vmatpush.xpose.msra.mxu0 0.0
  %1014 = vmatpush.xpose.msra.mxu0 0.0
  %1015 = vmatpush.xpose.msra.mxu0 0.0
  %1016 = vmatpush.xpose.msra.mxu0 0.0
  %1017 = vmatpush.xpose.msra.mxu0 0.0
  %1018 = vmatpush.xpose.msra.mxu0 0.0
  %1019 = vmatpush.xpose.msra.mxu0 0.0
  %1020 = vmatpush.xpose.msra.mxu0 0.0
  %1021 = vmatpush.xpose.msra.mxu0 0.0
  %1022 = vmatpush.xpose.msra.mxu0 0.0
  %1023 = vmatpush.xpose.msra.mxu0 0.0
  %1024 = vmatpush.xpose.msra.mxu0 0.0
  %1025 = vmatpush.xpose.msra.mxu0 %v150
  %1026 = vmatmul.f32.gmra.mxu0 %v54
  %v1027 = vpop.f32.mrf.mxu0
  %v1028 = vadd.f32 %v1008, %v1027
  %1029 = vdwg.mxu0
  %1030 = vmatpush.xpose.msra.mxu0 0.0
  %1031 = vmatpush.xpose.msra.mxu0 0.0
  %1032 = vmatpush.xpose.msra.mxu0 0.0
  %1033 = vmatpush.xpose.msra.mxu0 0.0
  %1034 = vmatpush.xpose.msra.mxu0 0.0
  %1035 = vmatpush.xpose.msra.mxu0 0.0
  %1036 = vmatpush.xpose.msra.mxu0 0.0
  %1037 = vmatpush.xpose.msra.mxu0 0.0
  %1038 = vmatpush.xpose.msra.mxu0 0.0
  %1039 = vmatpush.xpose.msra.mxu0 0.0
  %1040 = vmatpush.xpose.msra.mxu0 0.0
  %1041 = vmatpush.xpose.msra.mxu0 0.0
  %1042 = vmatpush.xpose.msra.mxu0 0.0
  %1043 = vmatpush.xpose.msra.mxu0 0.0
  %1044 = vmatpush.xpose.msra.mxu0 0.0
  %1045 = vmatpush.xpose.msra.mxu0 %v151
  %1046 = vmatmul.f32.gmra.mxu0 %v55
  %v1047 = vpop.f32.mrf.mxu0
  %v1048 = vadd.f32 %v1028, %v1047
  %1049 = vdwg.mxu0
  %1050 = vmatpush.xpose.msra.mxu0 0.0
  %1051 = vmatpush.xpose.msra.mxu0 0.0
  %1052 = vmatpush.xpose.msra.mxu0 0.0
  %1053 = vmatpush.xpose.msra.mxu0 0.0
  %1054 = vmatpush.xpose.msra.mxu0 0.0
  %1055 = vmatpush.xpose.msra.mxu0 0.0
  %1056 = vmatpush.xpose.msra.mxu0 0.0
  %1057 = vmatpush.xpose.msra.mxu0 0.0
  %1058 = vmatpush.xpose.msra.mxu0 0.0
  %1059 = vmatpush.xpose.msra.mxu0 0.0
  %1060 = vmatpush.xpose.msra.mxu0 0.0
  %1061 = vmatpush.xpose.msra.mxu0 0.0
  %1062 = vmatpush.xpose.msra.mxu0 0.0
  %1063 = vmatpush.xpose.msra.mxu0 0.0
  %1064 = vmatpush.xpose.msra.mxu0 0.0
  %1065 = vmatpush.xpose.msra.mxu0 %v152
  %1066 = vmatmul.f32.gmra.mxu0 %v56
  %v1067 = vpop.f32.mrf.mxu0
  %v1068 = vadd.f32 %v1048, %v1067
  %1069 = vdwg.mxu0
  %1070 = vmatpush.xpose.msra.mxu0 0.0
  %1071 = vmatpush.xpose.msra.mxu0 0.0
  %1072 = vmatpush.xpose.msra.mxu0 0.0
  %1073 = vmatpush.xpose.msra.mxu0 0.0
  %1074 = vmatpush.xpose.msra.mxu0 0.0
  %1075 = vmatpush.xpose.msra.mxu0 0.0
  %1076 = vmatpush.xpose.msra.mxu0 0.0
  %1077 = vmatpush.xpose.msra.mxu0 0.0
  %1078 = vmatpush.xpose.msra.mxu0 0.0
  %1079 = vmatpush.xpose.msra.mxu0 0.0
  %1080 = vmatpush.xpose.msra.mxu0 0.0
  %1081 = vmatpush.xpose.msra.mxu0 0.0
  %1082 = vmatpush.xpose.msra.mxu0 0.0
  %1083 = vmatpush.xpose.msra.mxu0 0.0
  %1084 = vmatpush.xpose.msra.mxu0 0.0
  %1085 = vmatpush.xpose.msra.mxu0 %v153
  %1086 = vmatmul.f32.gmra.mxu0 %v57
  %v1087 = vpop.f32.mrf.mxu0
  %v1088 = vadd.f32 %v1068, %v1087
  %1089 = vdwg.mxu0
  %1090 = vmatpush.xpose.msra.mxu0 0.0
  %1091 = vmatpush.xpose.msra.mxu0 0.0
  %1092 = vmatpush.xpose.msra.mxu0 0.0
  %1093 = vmatpush.xpose.msra.mxu0 0.0
  %1094 = vmatpush.xpose.msra.mxu0 0.0
  %1095 = vmatpush.xpose.msra.mxu0 0.0
  %1096 = vmatpush.xpose.msra.mxu0 0.0
  %1097 = vmatpush.xpose.msra.mxu0 0.0
  %1098 = vmatpush.xpose.msra.mxu0 0.0
  %1099 = vmatpush.xpose.msra.mxu0 0.0
  %1100 = vmatpush.xpose.msra.mxu0 0.0
  %1101 = vmatpush.xpose.msra.mxu0 0.0
  %1102 = vmatpush.xpose.msra.mxu0 0.0
  %1103 = vmatpush.xpose.msra.mxu0 0.0
  %1104 = vmatpush.xpose.msra.mxu0 0.0
  %1105 = vmatpush.xpose.msra.mxu0 %v154
  %1106 = vmatmul.f32.gmra.mxu0 %v58
  %v1107 = vpop.f32.mrf.mxu0
  %v1108 = vadd.f32 %v1088, %v1107
  %1109 = vdwg.mxu0
  %1110 = vmatpush.xpose.msra.mxu0 0.0
  %1111 = vmatpush.xpose.msra.mxu0 0.0
  %1112 = vmatpush.xpose.msra.mxu0 0.0
  %1113 = vmatpush.xpose.msra.mxu0 0.0
  %1114 = vmatpush.xpose.msra.mxu0 0.0
  %1115 = vmatpush.xpose.msra.mxu0 0.0
  %1116 = vmatpush.xpose.msra.mxu0 0.0
  %1117 = vmatpush.xpose.msra.mxu0 0.0
  %1118 = vmatpush.xpose.msra.mxu0 0.0
  %1119 = vmatpush.xpose.msra.mxu0 0.0
  %1120 = vmatpush.xpose.msra.mxu0 0.0
  %1121 = vmatpush.xpose.msra.mxu0 0.0
  %1122 = vmatpush.xpose.msra.mxu0 0.0
  %1123 = vmatpush.xpose.msra.mxu0 0.0
  %1124 = vmatpush.xpose.msra.mxu0 0.0
  %1125 = vmatpush.xpose.msra.mxu0 %v155
  %1126 = vmatmul.f32.gmra.mxu0 %v59
  %v1127 = vpop.f32.mrf.mxu0
  %v1128 = vadd.f32 %v1108, %v1127
  %1129 = vdwg.mxu0
  %1130 = vmatpush.xpose.msra.mxu0 0.0
  %1131 = vmatpush.xpose.msra.mxu0 0.0
  %1132 = vmatpush.xpose.msra.mxu0 0.0
  %1133 = vmatpush.xpose.msra.mxu0 0.0
  %1134 = vmatpush.xpose.msra.mxu0 0.0
  %1135 = vmatpush.xpose.msra.mxu0 0.0
  %1136 = vmatpush.xpose.msra.mxu0 0.0
  %1137 = vmatpush.xpose.msra.mxu0 0.0
  %1138 = vmatpush.xpose.msra.mxu0 0.0
  %1139 = vmatpush.xpose.msra.mxu0 0.0
  %1140 = vmatpush.xpose.msra.mxu0 0.0
  %1141 = vmatpush.xpose.msra.mxu0 0.0
  %1142 = vmatpush.xpose.msra.mxu0 0.0
  %1143 = vmatpush.xpose.msra.mxu0 0.0
  %1144 = vmatpush.xpose.msra.mxu0 0.0
  %1145 = vmatpush.xpose.msra.mxu0 %v156
  %1146 = vmatmul.f32.gmra.mxu0 %v60
  %v1147 = vpop.f32.mrf.mxu0
  %v1148 = vadd.f32 %v1128, %v1147
  %1149 = vdwg.mxu0
  %1150 = vmatpush.xpose.msra.mxu0 0.0
  %1151 = vmatpush.xpose.msra.mxu0 0.0
  %1152 = vmatpush.xpose.msra.mxu0 0.0
  %1153 = vmatpush.xpose.msra.mxu0 0.0
  %1154 = vmatpush.xpose.msra.mxu0 0.0
  %1155 = vmatpush.xpose.msra.mxu0 0.0
  %1156 = vmatpush.xpose.msra.mxu0 0.0
  %1157 = vmatpush.xpose.msra.mxu0 0.0
  %1158 = vmatpush.xpose.msra.mxu0 0.0
  %1159 = vmatpush.xpose.msra.mxu0 0.0
  %1160 = vmatpush.xpose.msra.mxu0 0.0
  %1161 = vmatpush.xpose.msra.mxu0 0.0
  %1162 = vmatpush.xpose.msra.mxu0 0.0
  %1163 = vmatpush.xpose.msra.mxu0 0.0
  %1164 = vmatpush.xpose.msra.mxu0 0.0
  %1165 = vmatpush.xpose.msra.mxu0 %v157
  %1166 = vmatmul.f32.gmra.mxu0 %v61
  %v1167 = vpop.f32.mrf.mxu0
  %v1168 = vadd.f32 %v1148, %v1167
  %1169 = vdwg.mxu0
  %1170 = vmatpush.xpose.msra.mxu0 0.0
  %1171 = vmatpush.xpose.msra.mxu0 0.0
  %1172 = vmatpush.xpose.msra.mxu0 0.0
  %1173 = vmatpush.xpose.msra.mxu0 0.0
  %1174 = vmatpush.xpose.msra.mxu0 0.0
  %1175 = vmatpush.xpose.msra.mxu0 0.0
  %1176 = vmatpush.xpose.msra.mxu0 0.0
  %1177 = vmatpush.xpose.msra.mxu0 0.0
  %1178 = vmatpush.xpose.msra.mxu0 0.0
  %1179 = vmatpush.xpose.msra.mxu0 0.0
  %1180 = vmatpush.xpose.msra.mxu0 0.0
  %1181 = vmatpush.xpose.msra.mxu0 0.0
  %1182 = vmatpush.xpose.msra.mxu0 0.0
  %1183 = vmatpush.xpose.msra.mxu0 0.0
  %1184 = vmatpush.xpose.msra.mxu0 0.0
  %1185 = vmatpush.xpose.msra.mxu0 %v158
  %1186 = vmatmul.f32.gmra.mxu0 %v62
  %v1187 = vpop.f32.mrf.mxu0
  %v1188 = vadd.f32 %v1168, %v1187
  %1189 = vdwg.mxu0
  %1190 = vmatpush.xpose.msra.mxu0 0.0
  %1191 = vmatpush.xpose.msra.mxu0 0.0
  %1192 = vmatpush.xpose.msra.mxu0 0.0
  %1193 = vmatpush.xpose.msra.mxu0 0.0
  %1194 = vmatpush.xpose.msra.mxu0 0.0
  %1195 = vmatpush.xpose.msra.mxu0 0.0
  %1196 = vmatpush.xpose.msra.mxu0 0.0
  %1197 = vmatpush.xpose.msra.mxu0 0.0
  %1198 = vmatpush.xpose.msra.mxu0 0.0
  %1199 = vmatpush.xpose.msra.mxu0 0.0
  %1200 = vmatpush.xpose.msra.mxu0 0.0
  %1201 = vmatpush.xpose.msra.mxu0 0.0
  %1202 = vmatpush.xpose.msra.mxu0 0.0
  %1203 = vmatpush.xpose.msra.mxu0 0.0
  %1204 = vmatpush.xpose.msra.mxu0 0.0
  %1205 = vmatpush.xpose.msra.mxu0 %v159
  %1206 = vmatmul.f32.gmra.mxu0 %v63
  %v1207 = vpop.f32.mrf.mxu0
  %v1208 = vadd.f32 %v1188, %v1207
  %1209 = vdwg.mxu0
  %1210 = vmatpush.xpose.msra.mxu0 0.0
  %1211 = vmatpush.xpose.msra.mxu0 0.0
  %1212 = vmatpush.xpose.msra.mxu0 0.0
  %1213 = vmatpush.xpose.msra.mxu0 0.0
  %1214 = vmatpush.xpose.msra.mxu0 0.0
  %1215 = vmatpush.xpose.msra.mxu0 0.0
  %1216 = vmatpush.xpose.msra.mxu0 0.0
  %1217 = vmatpush.xpose.msra.mxu0 0.0
  %1218 = vmatpush.xpose.msra.mxu0 0.0
  %1219 = vmatpush.xpose.msra.mxu0 0.0
  %1220 = vmatpush.xpose.msra.mxu0 0.0
  %1221 = vmatpush.xpose.msra.mxu0 0.0
  %1222 = vmatpush.xpose.msra.mxu0 0.0
  %1223 = vmatpush.xpose.msra.mxu0 0.0
  %1224 = vmatpush.xpose.msra.mxu0 0.0
  %1225 = vmatpush.xpose.msra.mxu0 %v160
  %1226 = vmatmul.f32.gmra.mxu0 %v64
  %v1227 = vpop.f32.mrf.mxu0
  %v1228 = vadd.f32 %v1208, %v1227
  %1229 = vdwg.mxu0
  %1230 = vmatpush.xpose.msra.mxu0 0.0
  %1231 = vmatpush.xpose.msra.mxu0 0.0
  %1232 = vmatpush.xpose.msra.mxu0 0.0
  %1233 = vmatpush.xpose.msra.mxu0 0.0
  %1234 = vmatpush.xpose.msra.mxu0 0.0
  %1235 = vmatpush.xpose.msra.mxu0 0.0
  %1236 = vmatpush.xpose.msra.mxu0 0.0
  %1237 = vmatpush.xpose.msra.mxu0 0.0
  %1238 = vmatpush.xpose.msra.mxu0 0.0
  %1239 = vmatpush.xpose.msra.mxu0 0.0
  %1240 = vmatpush.xpose.msra.mxu0 0.0
  %1241 = vmatpush.xpose.msra.mxu0 0.0
  %1242 = vmatpush.xpose.msra.mxu0 0.0
  %1243 = vmatpush.xpose.msra.mxu0 0.0
  %1244 = vmatpush.xpose.msra.mxu0 0.0
  %1245 = vmatpush.xpose.msra.mxu0 %v161
  %1246 = vmatmul.f32.gmra.mxu0 %v65
  %v1247 = vpop.f32.mrf.mxu0
  %v1248 = vadd.f32 %v1228, %v1247
  %1249 = vdwg.mxu0
  %1250 = vmatpush.xpose.msra.mxu0 0.0
  %1251 = vmatpush.xpose.msra.mxu0 0.0
  %1252 = vmatpush.xpose.msra.mxu0 0.0
  %1253 = vmatpush.xpose.msra.mxu0 0.0
  %1254 = vmatpush.xpose.msra.mxu0 0.0
  %1255 = vmatpush.xpose.msra.mxu0 0.0
  %1256 = vmatpush.xpose.msra.mxu0 0.0
  %1257 = vmatpush.xpose.msra.mxu0 0.0
  %1258 = vmatpush.xpose.msra.mxu0 0.0
  %1259 = vmatpush.xpose.msra.mxu0 0.0
  %1260 = vmatpush.xpose.msra.mxu0 0.0
  %1261 = vmatpush.xpose.msra.mxu0 0.0
  %1262 = vmatpush.xpose.msra.mxu0 0.0
  %1263 = vmatpush.xpose.msra.mxu0 0.0
  %1264 = vmatpush.xpose.msra.mxu0 0.0
  %1265 = vmatpush.xpose.msra.mxu0 %v162
  %1266 = vmatmul.f32.gmra.mxu0 %v66
  %v1267 = vpop.f32.mrf.mxu0
  %v1268 = vadd.f32 %v1248, %v1267
  %1269 = vdwg.mxu0
  %1270 = vmatpush.xpose.msra.mxu0 0.0
  %1271 = vmatpush.xpose.msra.mxu0 0.0
  %1272 = vmatpush.xpose.msra.mxu0 0.0
  %1273 = vmatpush.xpose.msra.mxu0 0.0
  %1274 = vmatpush.xpose.msra.mxu0 0.0
  %1275 = vmatpush.xpose.msra.mxu0 0.0
  %1276 = vmatpush.xpose.msra.mxu0 0.0
  %1277 = vmatpush.xpose.msra.mxu0 0.0
  %1278 = vmatpush.xpose.msra.mxu0 0.0
  %1279 = vmatpush.xpose.msra.mxu0 0.0
  %1280 = vmatpush.xpose.msra.mxu0 0.0
  %1281 = vmatpush.xpose.msra.mxu0 0.0
  %1282 = vmatpush.xpose.msra.mxu0 0.0
  %1283 = vmatpush.xpose.msra.mxu0 0.0
  %1284 = vmatpush.xpose.msra.mxu0 0.0
  %1285 = vmatpush.xpose.msra.mxu0 %v163
  %1286 = vmatmul.f32.gmra.mxu0 %v67
  %v1287 = vpop.f32.mrf.mxu0
  %v1288 = vadd.f32 %v1268, %v1287
  %1289 = vdwg.mxu0
  %1290 = vmatpush.xpose.msra.mxu0 0.0
  %1291 = vmatpush.xpose.msra.mxu0 0.0
  %1292 = vmatpush.xpose.msra.mxu0 0.0
  %1293 = vmatpush.xpose.msra.mxu0 0.0
  %1294 = vmatpush.xpose.msra.mxu0 0.0
  %1295 = vmatpush.xpose.msra.mxu0 0.0
  %1296 = vmatpush.xpose.msra.mxu0 0.0
  %1297 = vmatpush.xpose.msra.mxu0 0.0
  %1298 = vmatpush.xpose.msra.mxu0 0.0
  %1299 = vmatpush.xpose.msra.mxu0 0.0
  %1300 = vmatpush.xpose.msra.mxu0 0.0
  %1301 = vmatpush.xpose.msra.mxu0 0.0
  %1302 = vmatpush.xpose.msra.mxu0 0.0
  %1303 = vmatpush.xpose.msra.mxu0 0.0
  %1304 = vmatpush.xpose.msra.mxu0 0.0
  %1305 = vmatpush.xpose.msra.mxu0 %v164
  %1306 = vmatmul.f32.gmra.mxu0 %v68
  %v1307 = vpop.f32.mrf.mxu0
  %v1308 = vadd.f32 %v1288, %v1307
  %1309 = vdwg.mxu0
  %1310 = vmatpush.xpose.msra.mxu0 0.0
  %1311 = vmatpush.xpose.msra.mxu0 0.0
  %1312 = vmatpush.xpose.msra.mxu0 0.0
  %1313 = vmatpush.xpose.msra.mxu0 0.0
  %1314 = vmatpush.xpose.msra.mxu0 0.0
  %1315 = vmatpush.xpose.msra.mxu0 0.0
  %1316 = vmatpush.xpose.msra.mxu0 0.0
  %1317 = vmatpush.xpose.msra.mxu0 0.0
  %1318 = vmatpush.xpose.msra.mxu0 0.0
  %1319 = vmatpush.xpose.msra.mxu0 0.0
  %1320 = vmatpush.xpose.msra.mxu0 0.0
  %1321 = vmatpush.xpose.msra.mxu0 0.0
  %1322 = vmatpush.xpose.msra.mxu0 0.0
  %1323 = vmatpush.xpose.msra.mxu0 0.0
  %1324 = vmatpush.xpose.msra.mxu0 0.0
  %1325 = vmatpush.xpose.msra.mxu0 %v165
  %1326 = vmatmul.f32.gmra.mxu0 %v69
  %v1327 = vpop.f32.mrf.mxu0
  %v1328 = vadd.f32 %v1308, %v1327
  %1329 = vdwg.mxu0
  %1330 = vmatpush.xpose.msra.mxu0 0.0
  %1331 = vmatpush.xpose.msra.mxu0 0.0
  %1332 = vmatpush.xpose.msra.mxu0 0.0
  %1333 = vmatpush.xpose.msra.mxu0 0.0
  %1334 = vmatpush.xpose.msra.mxu0 0.0
  %1335 = vmatpush.xpose.msra.mxu0 0.0
  %1336 = vmatpush.xpose.msra.mxu0 0.0
  %1337 = vmatpush.xpose.msra.mxu0 0.0
  %1338 = vmatpush.xpose.msra.mxu0 0.0
  %1339 = vmatpush.xpose.msra.mxu0 0.0
  %1340 = vmatpush.xpose.msra.mxu0 0.0
  %1341 = vmatpush.xpose.msra.mxu0 0.0
  %1342 = vmatpush.xpose.msra.mxu0 0.0
  %1343 = vmatpush.xpose.msra.mxu0 0.0
  %1344 = vmatpush.xpose.msra.mxu0 0.0
  %1345 = vmatpush.xpose.msra.mxu0 %v166
  %1346 = vmatmul.f32.gmra.mxu0 %v70
  %v1347 = vpop.f32.mrf.mxu0
  %v1348 = vadd.f32 %v1328, %v1347
  %1349 = vdwg.mxu0
  %1350 = vmatpush.xpose.msra.mxu0 0.0
  %1351 = vmatpush.xpose.msra.mxu0 0.0
  %1352 = vmatpush.xpose.msra.mxu0 0.0
  %1353 = vmatpush.xpose.msra.mxu0 0.0
  %1354 = vmatpush.xpose.msra.mxu0 0.0
  %1355 = vmatpush.xpose.msra.mxu0 0.0
  %1356 = vmatpush.xpose.msra.mxu0 0.0
  %1357 = vmatpush.xpose.msra.mxu0 0.0
  %1358 = vmatpush.xpose.msra.mxu0 0.0
  %1359 = vmatpush.xpose.msra.mxu0 0.0
  %1360 = vmatpush.xpose.msra.mxu0 0.0
  %1361 = vmatpush.xpose.msra.mxu0 0.0
  %1362 = vmatpush.xpose.msra.mxu0 0.0
  %1363 = vmatpush.xpose.msra.mxu0 0.0
  %1364 = vmatpush.xpose.msra.mxu0 0.0
  %1365 = vmatpush.xpose.msra.mxu0 %v167
  %1366 = vmatmul.f32.gmra.mxu0 %v71
  %v1367 = vpop.f32.mrf.mxu0
  %v1368 = vadd.f32 %v1348, %v1367
  %1369 = vdwg.mxu0
  %1370 = vmatpush.xpose.msra.mxu0 0.0
  %1371 = vmatpush.xpose.msra.mxu0 0.0
  %1372 = vmatpush.xpose.msra.mxu0 0.0
  %1373 = vmatpush.xpose.msra.mxu0 0.0
  %1374 = vmatpush.xpose.msra.mxu0 0.0
  %1375 = vmatpush.xpose.msra.mxu0 0.0
  %1376 = vmatpush.xpose.msra.mxu0 0.0
  %1377 = vmatpush.xpose.msra.mxu0 0.0
  %1378 = vmatpush.xpose.msra.mxu0 0.0
  %1379 = vmatpush.xpose.msra.mxu0 0.0
  %1380 = vmatpush.xpose.msra.mxu0 0.0
  %1381 = vmatpush.xpose.msra.mxu0 0.0
  %1382 = vmatpush.xpose.msra.mxu0 0.0
  %1383 = vmatpush.xpose.msra.mxu0 0.0
  %1384 = vmatpush.xpose.msra.mxu0 0.0
  %1385 = vmatpush.xpose.msra.mxu0 %v168
  %1386 = vmatmul.f32.gmra.mxu0 %v72
  %v1387 = vpop.f32.mrf.mxu0
  %v1388 = vadd.f32 %v1368, %v1387
  %1389 = vdwg.mxu0
  %1390 = vmatpush.xpose.msra.mxu0 0.0
  %1391 = vmatpush.xpose.msra.mxu0 0.0
  %1392 = vmatpush.xpose.msra.mxu0 0.0
  %1393 = vmatpush.xpose.msra.mxu0 0.0
  %1394 = vmatpush.xpose.msra.mxu0 0.0
  %1395 = vmatpush.xpose.msra.mxu0 0.0
  %1396 = vmatpush.xpose.msra.mxu0 0.0
  %1397 = vmatpush.xpose.msra.mxu0 0.0
  %1398 = vmatpush.xpose.msra.mxu0 0.0
  %1399 = vmatpush.xpose.msra.mxu0 0.0
  %1400 = vmatpush.xpose.msra.mxu0 0.0
  %1401 = vmatpush.xpose.msra.mxu0 0.0
  %1402 = vmatpush.xpose.msra.mxu0 0.0
  %1403 = vmatpush.xpose.msra.mxu0 0.0
  %1404 = vmatpush.xpose.msra.mxu0 0.0
  %1405 = vmatpush.xpose.msra.mxu0 %v169
  %1406 = vmatmul.f32.gmra.mxu0 %v73
  %v1407 = vpop.f32.mrf.mxu0
  %v1408 = vadd.f32 %v1388, %v1407
  %1409 = vdwg.mxu0
  %1410 = vmatpush.xpose.msra.mxu0 0.0
  %1411 = vmatpush.xpose.msra.mxu0 0.0
  %1412 = vmatpush.xpose.msra.mxu0 0.0
  %1413 = vmatpush.xpose.msra.mxu0 0.0
  %1414 = vmatpush.xpose.msra.mxu0 0.0
  %1415 = vmatpush.xpose.msra.mxu0 0.0
  %1416 = vmatpush.xpose.msra.mxu0 0.0
  %1417 = vmatpush.xpose.msra.mxu0 0.0
  %1418 = vmatpush.xpose.msra.mxu0 0.0
  %1419 = vmatpush.xpose.msra.mxu0 0.0
  %1420 = vmatpush.xpose.msra.mxu0 0.0
  %1421 = vmatpush.xpose.msra.mxu0 0.0
  %1422 = vmatpush.xpose.msra.mxu0 0.0
  %1423 = vmatpush.xpose.msra.mxu0 0.0
  %1424 = vmatpush.xpose.msra.mxu0 0.0
  %1425 = vmatpush.xpose.msra.mxu0 %v170
  %1426 = vmatmul.f32.gmra.mxu0 %v74
  %v1427 = vpop.f32.mrf.mxu0
  %v1428 = vadd.f32 %v1408, %v1427
  %1429 = vdwg.mxu0
  %1430 = vmatpush.xpose.msra.mxu0 0.0
  %1431 = vmatpush.xpose.msra.mxu0 0.0
  %1432 = vmatpush.xpose.msra.mxu0 0.0
  %1433 = vmatpush.xpose.msra.mxu0 0.0
  %1434 = vmatpush.xpose.msra.mxu0 0.0
  %1435 = vmatpush.xpose.msra.mxu0 0.0
  %1436 = vmatpush.xpose.msra.mxu0 0.0
  %1437 = vmatpush.xpose.msra.mxu0 0.0
  %1438 = vmatpush.xpose.msra.mxu0 0.0
  %1439 = vmatpush.xpose.msra.mxu0 0.0
  %1440 = vmatpush.xpose.msra.mxu0 0.0
  %1441 = vmatpush.xpose.msra.mxu0 0.0
  %1442 = vmatpush.xpose.msra.mxu0 0.0
  %1443 = vmatpush.xpose.msra.mxu0 0.0
  %1444 = vmatpush.xpose.msra.mxu0 0.0
  %1445 = vmatpush.xpose.msra.mxu0 %v171
  %1446 = vmatmul.f32.gmra.mxu0 %v75
  %v1447 = vpop.f32.mrf.mxu0
  %v1448 = vadd.f32 %v1428, %v1447
  %1449 = vdwg.mxu0
  %1450 = vmatpush.xpose.msra.mxu0 0.0
  %1451 = vmatpush.xpose.msra.mxu0 0.0
  %1452 = vmatpush.xpose.msra.mxu0 0.0
  %1453 = vmatpush.xpose.msra.mxu0 0.0
  %1454 = vmatpush.xpose.msra.mxu0 0.0
  %1455 = vmatpush.xpose.msra.mxu0 0.0
  %1456 = vmatpush.xpose.msra.mxu0 0.0
  %1457 = vmatpush.xpose.msra.mxu0 0.0
  %1458 = vmatpush.xpose.msra.mxu0 0.0
  %1459 = vmatpush.xpose.msra.mxu0 0.0
  %1460 = vmatpush.xpose.msra.mxu0 0.0
  %1461 = vmatpush.xpose.msra.mxu0 0.0
  %1462 = vmatpush.xpose.msra.mxu0 0.0
  %1463 = vmatpush.xpose.msra.mxu0 0.0
  %1464 = vmatpush.xpose.msra.mxu0 0.0
  %1465 = vmatpush.xpose.msra.mxu0 %v172
  %1466 = vmatmul.f32.gmra.mxu0 %v76
  %v1467 = vpop.f32.mrf.mxu0
  %v1468 = vadd.f32 %v1448, %v1467
  %1469 = vdwg.mxu0
  %1470 = vmatpush.xpose.msra.mxu0 0.0
  %1471 = vmatpush.xpose.msra.mxu0 0.0
  %1472 = vmatpush.xpose.msra.mxu0 0.0
  %1473 = vmatpush.xpose.msra.mxu0 0.0
  %1474 = vmatpush.xpose.msra.mxu0 0.0
  %1475 = vmatpush.xpose.msra.mxu0 0.0
  %1476 = vmatpush.xpose.msra.mxu0 0.0
  %1477 = vmatpush.xpose.msra.mxu0 0.0
  %1478 = vmatpush.xpose.msra.mxu0 0.0
  %1479 = vmatpush.xpose.msra.mxu0 0.0
  %1480 = vmatpush.xpose.msra.mxu0 0.0
  %1481 = vmatpush.xpose.msra.mxu0 0.0
  %1482 = vmatpush.xpose.msra.mxu0 0.0
  %1483 = vmatpush.xpose.msra.mxu0 0.0
  %1484 = vmatpush.xpose.msra.mxu0 0.0
  %1485 = vmatpush.xpose.msra.mxu0 %v173
  %1486 = vmatmul.f32.gmra.mxu0 %v77
  %v1487 = vpop.f32.mrf.mxu0
  %v1488 = vadd.f32 %v1468, %v1487
  %1489 = vdwg.mxu0
  %1490 = vmatpush.xpose.msra.mxu0 0.0
  %1491 = vmatpush.xpose.msra.mxu0 0.0
  %1492 = vmatpush.xpose.msra.mxu0 0.0
  %1493 = vmatpush.xpose.msra.mxu0 0.0
  %1494 = vmatpush.xpose.msra.mxu0 0.0
  %1495 = vmatpush.xpose.msra.mxu0 0.0
  %1496 = vmatpush.xpose.msra.mxu0 0.0
  %1497 = vmatpush.xpose.msra.mxu0 0.0
  %1498 = vmatpush.xpose.msra.mxu0 0.0
  %1499 = vmatpush.xpose.msra.mxu0 0.0
  %1500 = vmatpush.xpose.msra.mxu0 0.0
  %1501 = vmatpush.xpose.msra.mxu0 0.0
  %1502 = vmatpush.xpose.msra.mxu0 0.0
  %1503 = vmatpush.xpose.msra.mxu0 0.0
  %1504 = vmatpush.xpose.msra.mxu0 0.0
  %1505 = vmatpush.xpose.msra.mxu0 %v174
  %1506 = vmatmul.f32.gmra.mxu0 %v78
  %v1507 = vpop.f32.mrf.mxu0
  %v1508 = vadd.f32 %v1488, %v1507
  %1509 = vdwg.mxu0
  %1510 = vmatpush.xpose.msra.mxu0 0.0
  %1511 = vmatpush.xpose.msra.mxu0 0.0
  %1512 = vmatpush.xpose.msra.mxu0 0.0
  %1513 = vmatpush.xpose.msra.mxu0 0.0
  %1514 = vmatpush.xpose.msra.mxu0 0.0
  %1515 = vmatpush.xpose.msra.mxu0 0.0
  %1516 = vmatpush.xpose.msra.mxu0 0.0
  %1517 = vmatpush.xpose.msra.mxu0 0.0
  %1518 = vmatpush.xpose.msra.mxu0 0.0
  %1519 = vmatpush.xpose.msra.mxu0 0.0
  %1520 = vmatpush.xpose.msra.mxu0 0.0
  %1521 = vmatpush.xpose.msra.mxu0 0.0
  %1522 = vmatpush.xpose.msra.mxu0 0.0
  %1523 = vmatpush.xpose.msra.mxu0 0.0
  %1524 = vmatpush.xpose.msra.mxu0 0.0
  %1525 = vmatpush.xpose.msra.mxu0 %v175
  %1526 = vmatmul.f32.gmra.mxu0 %v79
  %v1527 = vpop.f32.mrf.mxu0
  %v1528 = vadd.f32 %v1508, %v1527
  %1529 = vdwg.mxu0
  %1530 = vmatpush.xpose.msra.mxu0 0.0
  %1531 = vmatpush.xpose.msra.mxu0 0.0
  %1532 = vmatpush.xpose.msra.mxu0 0.0
  %1533 = vmatpush.xpose.msra.mxu0 0.0
  %1534 = vmatpush.xpose.msra.mxu0 0.0
  %1535 = vmatpush.xpose.msra.mxu0 0.0
  %1536 = vmatpush.xpose.msra.mxu0 0.0
  %1537 = vmatpush.xpose.msra.mxu0 0.0
  %1538 = vmatpush.xpose.msra.mxu0 0.0
  %1539 = vmatpush.xpose.msra.mxu0 0.0
  %1540 = vmatpush.xpose.msra.mxu0 0.0
  %1541 = vmatpush.xpose.msra.mxu0 0.0
  %1542 = vmatpush.xpose.msra.mxu0 0.0
  %1543 = vmatpush.xpose.msra.mxu0 0.0
  %1544 = vmatpush.xpose.msra.mxu0 0.0
  %1545 = vmatpush.xpose.msra.mxu0 %v176
  %1546 = vmatmul.f32.gmra.mxu0 %v80
  %v1547 = vpop.f32.mrf.mxu0
  %v1548 = vadd.f32 %v1528, %v1547
  %1549 = vdwg.mxu0
  %1550 = vmatpush.xpose.msra.mxu0 0.0
  %1551 = vmatpush.xpose.msra.mxu0 0.0
  %1552 = vmatpush.xpose.msra.mxu0 0.0
  %1553 = vmatpush.xpose.msra.mxu0 0.0
  %1554 = vmatpush.xpose.msra.mxu0 0.0
  %1555 = vmatpush.xpose.msra.mxu0 0.0
  %1556 = vmatpush.xpose.msra.mxu0 0.0
  %1557 = vmatpush.xpose.msra.mxu0 0.0
  %1558 = vmatpush.xpose.msra.mxu0 0.0
  %1559 = vmatpush.xpose.msra.mxu0 0.0
  %1560 = vmatpush.xpose.msra.mxu0 0.0
  %1561 = vmatpush.xpose.msra.mxu0 0.0
  %1562 = vmatpush.xpose.msra.mxu0 0.0
  %1563 = vmatpush.xpose.msra.mxu0 0.0
  %1564 = vmatpush.xpose.msra.mxu0 0.0
  %1565 = vmatpush.xpose.msra.mxu0 %v177
  %1566 = vmatmul.f32.gmra.mxu0 %v81
  %v1567 = vpop.f32.mrf.mxu0
  %v1568 = vadd.f32 %v1548, %v1567
  %1569 = vdwg.mxu0
  %1570 = vmatpush.xpose.msra.mxu0 0.0
  %1571 = vmatpush.xpose.msra.mxu0 0.0
  %1572 = vmatpush.xpose.msra.mxu0 0.0
  %1573 = vmatpush.xpose.msra.mxu0 0.0
  %1574 = vmatpush.xpose.msra.mxu0 0.0
  %1575 = vmatpush.xpose.msra.mxu0 0.0
  %1576 = vmatpush.xpose.msra.mxu0 0.0
  %1577 = vmatpush.xpose.msra.mxu0 0.0
  %1578 = vmatpush.xpose.msra.mxu0 0.0
  %1579 = vmatpush.xpose.msra.mxu0 0.0
  %1580 = vmatpush.xpose.msra.mxu0 0.0
  %1581 = vmatpush.xpose.msra.mxu0 0.0
  %1582 = vmatpush.xpose.msra.mxu0 0.0
  %1583 = vmatpush.xpose.msra.mxu0 0.0
  %1584 = vmatpush.xpose.msra.mxu0 0.0
  %1585 = vmatpush.xpose.msra.mxu0 %v178
  %1586 = vmatmul.f32.gmra.mxu0 %v82
  %v1587 = vpop.f32.mrf.mxu0
  %v1588 = vadd.f32 %v1568, %v1587
  %1589 = vdwg.mxu0
  %1590 = vmatpush.xpose.msra.mxu0 0.0
  %1591 = vmatpush.xpose.msra.mxu0 0.0
  %1592 = vmatpush.xpose.msra.mxu0 0.0
  %1593 = vmatpush.xpose.msra.mxu0 0.0
  %1594 = vmatpush.xpose.msra.mxu0 0.0
  %1595 = vmatpush.xpose.msra.mxu0 0.0
  %1596 = vmatpush.xpose.msra.mxu0 0.0
  %1597 = vmatpush.xpose.msra.mxu0 0.0
  %1598 = vmatpush.xpose.msra.mxu0 0.0
  %1599 = vmatpush.xpose.msra.mxu0 0.0
  %1600 = vmatpush.xpose.msra.mxu0 0.0
  %1601 = vmatpush.xpose.msra.mxu0 0.0
  %1602 = vmatpush.xpose.msra.mxu0 0.0
  %1603 = vmatpush.xpose.msra.mxu0 0.0
  %1604 = vmatpush.xpose.msra.mxu0 0.0
  %1605 = vmatpush.xpose.msra.mxu0 %v179
  %1606 = vmatmul.f32.gmra.mxu0 %v83
  %v1607 = vpop.f32.mrf.mxu0
  %v1608 = vadd.f32 %v1588, %v1607
  %1609 = vdwg.mxu0
  %1610 = vmatpush.xpose.msra.mxu0 0.0
  %1611 = vmatpush.xpose.msra.mxu0 0.0
  %1612 = vmatpush.xpose.msra.mxu0 0.0
  %1613 = vmatpush.xpose.msra.mxu0 0.0
  %1614 = vmatpush.xpose.msra.mxu0 0.0
  %1615 = vmatpush.xpose.msra.mxu0 0.0
  %1616 = vmatpush.xpose.msra.mxu0 0.0
  %1617 = vmatpush.xpose.msra.mxu0 0.0
  %1618 = vmatpush.xpose.msra.mxu0 0.0
  %1619 = vmatpush.xpose.msra.mxu0 0.0
  %1620 = vmatpush.xpose.msra.mxu0 0.0
  %1621 = vmatpush.xpose.msra.mxu0 0.0
  %1622 = vmatpush.xpose.msra.mxu0 0.0
  %1623 = vmatpush.xpose.msra.mxu0 0.0
  %1624 = vmatpush.xpose.msra.mxu0 0.0
  %1625 = vmatpush.xpose.msra.mxu0 %v180
  %1626 = vmatmul.f32.gmra.mxu0 %v84
  %v1627 = vpop.f32.mrf.mxu0
  %v1628 = vadd.f32 %v1608, %v1627
  %1629 = vdwg.mxu0
  %1630 = vmatpush.xpose.msra.mxu0 0.0
  %1631 = vmatpush.xpose.msra.mxu0 0.0
  %1632 = vmatpush.xpose.msra.mxu0 0.0
  %1633 = vmatpush.xpose.msra.mxu0 0.0
  %1634 = vmatpush.xpose.msra.mxu0 0.0
  %1635 = vmatpush.xpose.msra.mxu0 0.0
  %1636 = vmatpush.xpose.msra.mxu0 0.0
  %1637 = vmatpush.xpose.msra.mxu0 0.0
  %1638 = vmatpush.xpose.msra.mxu0 0.0
  %1639 = vmatpush.xpose.msra.mxu0 0.0
  %1640 = vmatpush.xpose.msra.mxu0 0.0
  %1641 = vmatpush.xpose.msra.mxu0 0.0
  %1642 = vmatpush.xpose.msra.mxu0 0.0
  %1643 = vmatpush.xpose.msra.mxu0 0.0
  %1644 = vmatpush.xpose.msra.mxu0 0.0
  %1645 = vmatpush.xpose.msra.mxu0 %v181
  %1646 = vmatmul.f32.gmra.mxu0 %v85
  %v1647 = vpop.f32.mrf.mxu0
  %v1648 = vadd.f32 %v1628, %v1647
  %1649 = vdwg.mxu0
  %1650 = vmatpush.xpose.msra.mxu0 0.0
  %1651 = vmatpush.xpose.msra.mxu0 0.0
  %1652 = vmatpush.xpose.msra.mxu0 0.0
  %1653 = vmatpush.xpose.msra.mxu0 0.0
  %1654 = vmatpush.xpose.msra.mxu0 0.0
  %1655 = vmatpush.xpose.msra.mxu0 0.0
  %1656 = vmatpush.xpose.msra.mxu0 0.0
  %1657 = vmatpush.xpose.msra.mxu0 0.0
  %1658 = vmatpush.xpose.msra.mxu0 0.0
  %1659 = vmatpush.xpose.msra.mxu0 0.0
  %1660 = vmatpush.xpose.msra.mxu0 0.0
  %1661 = vmatpush.xpose.msra.mxu0 0.0
  %1662 = vmatpush.xpose.msra.mxu0 0.0
  %1663 = vmatpush.xpose.msra.mxu0 0.0
  %1664 = vmatpush.xpose.msra.mxu0 0.0
  %1665 = vmatpush.xpose.msra.mxu0 %v182
  %1666 = vmatmul.f32.gmra.mxu0 %v86
  %v1667 = vpop.f32.mrf.mxu0
  %v1668 = vadd.f32 %v1648, %v1667
  %1669 = vdwg.mxu0
  %1670 = vmatpush.xpose.msra.mxu0 0.0
  %1671 = vmatpush.xpose.msra.mxu0 0.0
  %1672 = vmatpush.xpose.msra.mxu0 0.0
  %1673 = vmatpush.xpose.msra.mxu0 0.0
  %1674 = vmatpush.xpose.msra.mxu0 0.0
  %1675 = vmatpush.xpose.msra.mxu0 0.0
  %1676 = vmatpush.xpose.msra.mxu0 0.0
  %1677 = vmatpush.xpose.msra.mxu0 0.0
  %1678 = vmatpush.xpose.msra.mxu0 0.0
  %1679 = vmatpush.xpose.msra.mxu0 0.0
  %1680 = vmatpush.xpose.msra.mxu0 0.0
  %1681 = vmatpush.xpose.msra.mxu0 0.0
  %1682 = vmatpush.xpose.msra.mxu0 0.0
  %1683 = vmatpush.xpose.msra.mxu0 0.0
  %1684 = vmatpush.xpose.msra.mxu0 0.0
  %1685 = vmatpush.xpose.msra.mxu0 %v183
  %1686 = vmatmul.f32.gmra.mxu0 %v87
  %v1687 = vpop.f32.mrf.mxu0
  %v1688 = vadd.f32 %v1668, %v1687
  %1689 = vdwg.mxu0
  %1690 = vmatpush.xpose.msra.mxu0 0.0
  %1691 = vmatpush.xpose.msra.mxu0 0.0
  %1692 = vmatpush.xpose.msra.mxu0 0.0
  %1693 = vmatpush.xpose.msra.mxu0 0.0
  %1694 = vmatpush.xpose.msra.mxu0 0.0
  %1695 = vmatpush.xpose.msra.mxu0 0.0
  %1696 = vmatpush.xpose.msra.mxu0 0.0
  %1697 = vmatpush.xpose.msra.mxu0 0.0
  %1698 = vmatpush.xpose.msra.mxu0 0.0
  %1699 = vmatpush.xpose.msra.mxu0 0.0
  %1700 = vmatpush.xpose.msra.mxu0 0.0
  %1701 = vmatpush.xpose.msra.mxu0 0.0
  %1702 = vmatpush.xpose.msra.mxu0 0.0
  %1703 = vmatpush.xpose.msra.mxu0 0.0
  %1704 = vmatpush.xpose.msra.mxu0 0.0
  %1705 = vmatpush.xpose.msra.mxu0 %v184
  %1706 = vmatmul.f32.gmra.mxu0 %v88
  %v1707 = vpop.f32.mrf.mxu0
  %v1708 = vadd.f32 %v1688, %v1707
  %1709 = vdwg.mxu0
  %1710 = vmatpush.xpose.msra.mxu0 0.0
  %1711 = vmatpush.xpose.msra.mxu0 0.0
  %1712 = vmatpush.xpose.msra.mxu0 0.0
  %1713 = vmatpush.xpose.msra.mxu0 0.0
  %1714 = vmatpush.xpose.msra.mxu0 0.0
  %1715 = vmatpush.xpose.msra.mxu0 0.0
  %1716 = vmatpush.xpose.msra.mxu0 0.0
  %1717 = vmatpush.xpose.msra.mxu0 0.0
  %1718 = vmatpush.xpose.msra.mxu0 0.0
  %1719 = vmatpush.xpose.msra.mxu0 0.0
  %1720 = vmatpush.xpose.msra.mxu0 0.0
  %1721 = vmatpush.xpose.msra.mxu0 0.0
  %1722 = vmatpush.xpose.msra.mxu0 0.0
  %1723 = vmatpush.xpose.msra.mxu0 0.0
  %1724 = vmatpush.xpose.msra.mxu0 0.0
  %1725 = vmatpush.xpose.msra.mxu0 %v185
  %1726 = vmatmul.f32.gmra.mxu0 %v89
  %v1727 = vpop.f32.mrf.mxu0
  %v1728 = vadd.f32 %v1708, %v1727
  %1729 = vdwg.mxu0
  %1730 = vmatpush.xpose.msra.mxu0 0.0
  %1731 = vmatpush.xpose.msra.mxu0 0.0
  %1732 = vmatpush.xpose.msra.mxu0 0.0
  %1733 = vmatpush.xpose.msra.mxu0 0.0
  %1734 = vmatpush.xpose.msra.mxu0 0.0
  %1735 = vmatpush.xpose.msra.mxu0 0.0
  %1736 = vmatpush.xpose.msra.mxu0 0.0
  %1737 = vmatpush.xpose.msra.mxu0 0.0
  %1738 = vmatpush.xpose.msra.mxu0 0.0
  %1739 = vmatpush.xpose.msra.mxu0 0.0
  %1740 = vmatpush.xpose.msra.mxu0 0.0
  %1741 = vmatpush.xpose.msra.mxu0 0.0
  %1742 = vmatpush.xpose.msra.mxu0 0.0
  %1743 = vmatpush.xpose.msra.mxu0 0.0
  %1744 = vmatpush.xpose.msra.mxu0 0.0
  %1745 = vmatpush.xpose.msra.mxu0 %v186
  %1746 = vmatmul.f32.gmra.mxu0 %v90
  %v1747 = vpop.f32.mrf.mxu0
  %v1748 = vadd.f32 %v1728, %v1747
  %1749 = vdwg.mxu0
  %1750 = vmatpush.xpose.msra.mxu0 0.0
  %1751 = vmatpush.xpose.msra.mxu0 0.0
  %1752 = vmatpush.xpose.msra.mxu0 0.0
  %1753 = vmatpush.xpose.msra.mxu0 0.0
  %1754 = vmatpush.xpose.msra.mxu0 0.0
  %1755 = vmatpush.xpose.msra.mxu0 0.0
  %1756 = vmatpush.xpose.msra.mxu0 0.0
  %1757 = vmatpush.xpose.msra.mxu0 0.0
  %1758 = vmatpush.xpose.msra.mxu0 0.0
  %1759 = vmatpush.xpose.msra.mxu0 0.0
  %1760 = vmatpush.xpose.msra.mxu0 0.0
  %1761 = vmatpush.xpose.msra.mxu0 0.0
  %1762 = vmatpush.xpose.msra.mxu0 0.0
  %1763 = vmatpush.xpose.msra.mxu0 0.0
  %1764 = vmatpush.xpose.msra.mxu0 0.0
  %1765 = vmatpush.xpose.msra.mxu0 %v187
  %1766 = vmatmul.f32.gmra.mxu0 %v91
  %v1767 = vpop.f32.mrf.mxu0
  %v1768 = vadd.f32 %v1748, %v1767
  %1769 = vdwg.mxu0
  %1770 = vmatpush.xpose.msra.mxu0 0.0
  %1771 = vmatpush.xpose.msra.mxu0 0.0
  %1772 = vmatpush.xpose.msra.mxu0 0.0
  %1773 = vmatpush.xpose.msra.mxu0 0.0
  %1774 = vmatpush.xpose.msra.mxu0 0.0
  %1775 = vmatpush.xpose.msra.mxu0 0.0
  %1776 = vmatpush.xpose.msra.mxu0 0.0
  %1777 = vmatpush.xpose.msra.mxu0 0.0
  %1778 = vmatpush.xpose.msra.mxu0 0.0
  %1779 = vmatpush.xpose.msra.mxu0 0.0
  %1780 = vmatpush.xpose.msra.mxu0 0.0
  %1781 = vmatpush.xpose.msra.mxu0 0.0
  %1782 = vmatpush.xpose.msra.mxu0 0.0
  %1783 = vmatpush.xpose.msra.mxu0 0.0
  %1784 = vmatpush.xpose.msra.mxu0 0.0
  %1785 = vmatpush.xpose.msra.mxu0 %v188
  %1786 = vmatmul.f32.gmra.mxu0 %v92
  %v1787 = vpop.f32.mrf.mxu0
  %v1788 = vadd.f32 %v1768, %v1787
  %1789 = vdwg.mxu0
  %1790 = vmatpush.xpose.msra.mxu0 0.0
  %1791 = vmatpush.xpose.msra.mxu0 0.0
  %1792 = vmatpush.xpose.msra.mxu0 0.0
  %1793 = vmatpush.xpose.msra.mxu0 0.0
  %1794 = vmatpush.xpose.msra.mxu0 0.0
  %1795 = vmatpush.xpose.msra.mxu0 0.0
  %1796 = vmatpush.xpose.msra.mxu0 0.0
  %1797 = vmatpush.xpose.msra.mxu0 0.0
  %1798 = vmatpush.xpose.msra.mxu0 0.0
  %1799 = vmatpush.xpose.msra.mxu0 0.0
  %1800 = vmatpush.xpose.msra.mxu0 0.0
  %1801 = vmatpush.xpose.msra.mxu0 0.0
  %1802 = vmatpush.xpose.msra.mxu0 0.0
  %1803 = vmatpush.xpose.msra.mxu0 0.0
  %1804 = vmatpush.xpose.msra.mxu0 0.0
  %1805 = vmatpush.xpose.msra.mxu0 %v189
  %1806 = vmatmul.f32.gmra.mxu0 %v93
  %v1807 = vpop.f32.mrf.mxu0
  %v1808 = vadd.f32 %v1788, %v1807
  %1809 = vdwg.mxu0
  %1810 = vmatpush.xpose.msra.mxu0 0.0
  %1811 = vmatpush.xpose.msra.mxu0 0.0
  %1812 = vmatpush.xpose.msra.mxu0 0.0
  %1813 = vmatpush.xpose.msra.mxu0 0.0
  %1814 = vmatpush.xpose.msra.mxu0 0.0
  %1815 = vmatpush.xpose.msra.mxu0 0.0
  %1816 = vmatpush.xpose.msra.mxu0 0.0
  %1817 = vmatpush.xpose.msra.mxu0 0.0
  %1818 = vmatpush.xpose.msra.mxu0 0.0
  %1819 = vmatpush.xpose.msra.mxu0 0.0
  %1820 = vmatpush.xpose.msra.mxu0 0.0
  %1821 = vmatpush.xpose.msra.mxu0 0.0
  %1822 = vmatpush.xpose.msra.mxu0 0.0
  %1823 = vmatpush.xpose.msra.mxu0 0.0
  %1824 = vmatpush.xpose.msra.mxu0 0.0
  %1825 = vmatpush.xpose.msra.mxu0 %v190
  %1826 = vmatmul.f32.gmra.mxu0 %v94
  %v1827 = vpop.f32.mrf.mxu0
  %v1828 = vadd.f32 %v1808, %v1827
  %1829 = vdwg.mxu0
  %1830 = vmatpush.xpose.msra.mxu0 0.0
  %1831 = vmatpush.xpose.msra.mxu0 0.0
  %1832 = vmatpush.xpose.msra.mxu0 0.0
  %1833 = vmatpush.xpose.msra.mxu0 0.0
  %1834 = vmatpush.xpose.msra.mxu0 0.0
  %1835 = vmatpush.xpose.msra.mxu0 0.0
  %1836 = vmatpush.xpose.msra.mxu0 0.0
  %1837 = vmatpush.xpose.msra.mxu0 0.0
  %1838 = vmatpush.xpose.msra.mxu0 0.0
  %1839 = vmatpush.xpose.msra.mxu0 0.0
  %1840 = vmatpush.xpose.msra.mxu0 0.0
  %1841 = vmatpush.xpose.msra.mxu0 0.0
  %1842 = vmatpush.xpose.msra.mxu0 0.0
  %1843 = vmatpush.xpose.msra.mxu0 0.0
  %1844 = vmatpush.xpose.msra.mxu0 0.0
  %1845 = vmatpush.xpose.msra.mxu0 %v191
  %1846 = vmatmul.f32.gmra.mxu0 %v95
  %v1847 = vpop.f32.mrf.mxu0
  %v1848 = vadd.f32 %v1828, %v1847
  %1849 = vdwg.mxu0
  %1850 = vmatpush.xpose.msra.mxu0 0.0
  %1851 = vmatpush.xpose.msra.mxu0 0.0
  %1852 = vmatpush.xpose.msra.mxu0 0.0
  %1853 = vmatpush.xpose.msra.mxu0 0.0
  %1854 = vmatpush.xpose.msra.mxu0 0.0
  %1855 = vmatpush.xpose.msra.mxu0 0.0
  %1856 = vmatpush.xpose.msra.mxu0 0.0
  %1857 = vmatpush.xpose.msra.mxu0 0.0
  %1858 = vmatpush.xpose.msra.mxu0 0.0
  %1859 = vmatpush.xpose.msra.mxu0 0.0
  %1860 = vmatpush.xpose.msra.mxu0 0.0
  %1861 = vmatpush.xpose.msra.mxu0 0.0
  %1862 = vmatpush.xpose.msra.mxu0 0.0
  %1863 = vmatpush.xpose.msra.mxu0 0.0
  %1864 = vmatpush.xpose.msra.mxu0 0.0
  %1865 = vmatpush.xpose.msra.mxu0 %v192
  %1866 = vmatmul.f32.gmra.mxu0 %v96
  %v1867 = vpop.f32.mrf.mxu0
  %v1868 = vadd.f32 %v1848, %v1867
  %1869 = vdwg.mxu0
  %1870 = vmatpush.xpose.msra.mxu0 0.0
  %1871 = vmatpush.xpose.msra.mxu0 0.0
  %1872 = vmatpush.xpose.msra.mxu0 0.0
  %1873 = vmatpush.xpose.msra.mxu0 0.0
  %1874 = vmatpush.xpose.msra.mxu0 0.0
  %1875 = vmatpush.xpose.msra.mxu0 0.0
  %1876 = vmatpush.xpose.msra.mxu0 0.0
  %1877 = vmatpush.xpose.msra.mxu0 0.0
  %1878 = vmatpush.xpose.msra.mxu0 0.0
  %1879 = vmatpush.xpose.msra.mxu0 0.0
  %1880 = vmatpush.xpose.msra.mxu0 0.0
  %1881 = vmatpush.xpose.msra.mxu0 0.0
  %1882 = vmatpush.xpose.msra.mxu0 0.0
  %1883 = vmatpush.xpose.msra.mxu0 0.0
  %1884 = vmatpush.xpose.msra.mxu0 0.0
  %1885 = vmatpush.xpose.msra.mxu0 %v193
  %1886 = vmatmul.f32.gmra.mxu0 %v97
  %v1887 = vpop.f32.mrf.mxu0
  %v1888 = vadd.f32 %v1868, %v1887
  %1889 = vdwg.mxu0
  %1890 = vmatpush.xpose.msra.mxu0 0.0
  %1891 = vmatpush.xpose.msra.mxu0 0.0
  %1892 = vmatpush.xpose.msra.mxu0 0.0
  %1893 = vmatpush.xpose.msra.mxu0 0.0
  %1894 = vmatpush.xpose.msra.mxu0 0.0
  %1895 = vmatpush.xpose.msra.mxu0 0.0
  %1896 = vmatpush.xpose.msra.mxu0 0.0
  %1897 = vmatpush.xpose.msra.mxu0 0.0
  %1898 = vmatpush.xpose.msra.mxu0 0.0
  %1899 = vmatpush.xpose.msra.mxu0 0.0
  %1900 = vmatpush.xpose.msra.mxu0 0.0
  %1901 = vmatpush.xpose.msra.mxu0 0.0
  %1902 = vmatpush.xpose.msra.mxu0 0.0
  %1903 = vmatpush.xpose.msra.mxu0 0.0
  %1904 = vmatpush.xpose.msra.mxu0 0.0
  %1905 = vmatpush.xpose.msra.mxu0 %v194
  %1906 = vmatmul.f32.gmra.mxu0 %v98
  %v1907 = vpop.f32.mrf.mxu0
  %v1908 = vadd.f32 %v1888, %v1907
  %1909 = vdwg.mxu0
  %1910 = vmatpush.xpose.msra.mxu0 0.0
  %1911 = vmatpush.xpose.msra.mxu0 0.0
  %1912 = vmatpush.xpose.msra.mxu0 0.0
  %1913 = vmatpush.xpose.msra.mxu0 0.0
  %1914 = vmatpush.xpose.msra.mxu0 0.0
  %1915 = vmatpush.xpose.msra.mxu0 0.0
  %1916 = vmatpush.xpose.msra.mxu0 0.0
  %1917 = vmatpush.xpose.msra.mxu0 0.0
  %1918 = vmatpush.xpose.msra.mxu0 0.0
  %1919 = vmatpush.xpose.msra.mxu0 0.0
  %1920 = vmatpush.xpose.msra.mxu0 0.0
  %1921 = vmatpush.xpose.msra.mxu0 0.0
  %1922 = vmatpush.xpose.msra.mxu0 0.0
  %1923 = vmatpush.xpose.msra.mxu0 0.0
  %1924 = vmatpush.xpose.msra.mxu0 0.0
  %1925 = vmatpush.xpose.msra.mxu0 %v195
  %1926 = vmatmul.f32.gmra.mxu0 %v99
  %v1927 = vpop.f32.mrf.mxu0
  %v1928 = vadd.f32 %v1908, %v1927
  %1929 = vdwg.mxu0
  %1930 = vmatpush.xpose.msra.mxu0 0.0
  %1931 = vmatpush.xpose.msra.mxu0 0.0
  %1932 = vmatpush.xpose.msra.mxu0 0.0
  %1933 = vmatpush.xpose.msra.mxu0 0.0
  %1934 = vmatpush.xpose.msra.mxu0 0.0
  %1935 = vmatpush.xpose.msra.mxu0 0.0
  %1936 = vmatpush.xpose.msra.mxu0 0.0
  %1937 = vmatpush.xpose.msra.mxu0 0.0
  %1938 = vmatpush.xpose.msra.mxu0 0.0
  %1939 = vmatpush.xpose.msra.mxu0 0.0
  %1940 = vmatpush.xpose.msra.mxu0 0.0
  %1941 = vmatpush.xpose.msra.mxu0 0.0
  %1942 = vmatpush.xpose.msra.mxu0 0.0
  %1943 = vmatpush.xpose.msra.mxu0 0.0
  %1944 = vmatpush.xpose.msra.mxu0 0.0
  %1945 = vmatpush.xpose.msra.mxu0 %v196
  %1946 = vmatmul.f32.gmra.mxu0 %v100
  %v1947 = vpop.f32.mrf.mxu0
  %v1948 = vadd.f32 %v1928, %v1947
  %1949 = vdwg.mxu0
  %1950 = vmatpush.xpose.msra.mxu0 0.0
  %1951 = vmatpush.xpose.msra.mxu0 0.0
  %1952 = vmatpush.xpose.msra.mxu0 0.0
  %1953 = vmatpush.xpose.msra.mxu0 0.0
  %1954 = vmatpush.xpose.msra.mxu0 0.0
  %1955 = vmatpush.xpose.msra.mxu0 0.0
  %1956 = vmatpush.xpose.msra.mxu0 0.0
  %1957 = vmatpush.xpose.msra.mxu0 0.0
  %1958 = vmatpush.xpose.msra.mxu0 0.0
  %1959 = vmatpush.xpose.msra.mxu0 0.0
  %1960 = vmatpush.xpose.msra.mxu0 0.0
  %1961 = vmatpush.xpose.msra.mxu0 0.0
  %1962 = vmatpush.xpose.msra.mxu0 0.0
  %1963 = vmatpush.xpose.msra.mxu0 0.0
  %1964 = vmatpush.xpose.msra.mxu0 0.0
  %1965 = vmatpush.xpose.msra.mxu0 %v197
  %1966 = vmatmul.f32.gmra.mxu0 %v101
  %v1967 = vpop.f32.mrf.mxu0
  %v1968 = vadd.f32 %v1948, %v1967
  %1969 = vdwg.mxu0
  %1970 = vmatpush.xpose.msra.mxu0 0.0
  %1971 = vmatpush.xpose.msra.mxu0 0.0
  %1972 = vmatpush.xpose.msra.mxu0 0.0
  %1973 = vmatpush.xpose.msra.mxu0 0.0
  %1974 = vmatpush.xpose.msra.mxu0 0.0
  %1975 = vmatpush.xpose.msra.mxu0 0.0
  %1976 = vmatpush.xpose.msra.mxu0 0.0
  %1977 = vmatpush.xpose.msra.mxu0 0.0
  %1978 = vmatpush.xpose.msra.mxu0 0.0
  %1979 = vmatpush.xpose.msra.mxu0 0.0
  %1980 = vmatpush.xpose.msra.mxu0 0.0
  %1981 = vmatpush.xpose.msra.mxu0 0.0
  %1982 = vmatpush.xpose.msra.mxu0 0.0
  %1983 = vmatpush.xpose.msra.mxu0 0.0
  %1984 = vmatpush.xpose.msra.mxu0 0.0
  %1985 = vmatpush.xpose.msra.mxu0 %v198
  %1986 = vmatmul.f32.gmra.mxu0 %v102
  %v1987 = vpop.f32.mrf.mxu0
  %v1988 = vadd.f32 %v1968, %v1987
  %1989 = vdwg.mxu0
  %1990 = vmatpush.xpose.msra.mxu0 0.0
  %1991 = vmatpush.xpose.msra.mxu0 0.0
  %1992 = vmatpush.xpose.msra.mxu0 0.0
  %1993 = vmatpush.xpose.msra.mxu0 0.0
  %1994 = vmatpush.xpose.msra.mxu0 0.0
  %1995 = vmatpush.xpose.msra.mxu0 0.0
  %1996 = vmatpush.xpose.msra.mxu0 0.0
  %1997 = vmatpush.xpose.msra.mxu0 0.0
  %1998 = vmatpush.xpose.msra.mxu0 0.0
  %1999 = vmatpush.xpose.msra.mxu0 0.0
  %2000 = vmatpush.xpose.msra.mxu0 0.0
  %2001 = vmatpush.xpose.msra.mxu0 0.0
  %2002 = vmatpush.xpose.msra.mxu0 0.0
  %2003 = vmatpush.xpose.msra.mxu0 0.0
  %2004 = vmatpush.xpose.msra.mxu0 0.0
  %2005 = vmatpush.xpose.msra.mxu0 %v199
  %2006 = vmatmul.f32.gmra.mxu0 %v103
  %v2007 = vpop.f32.mrf.mxu0
  %v2008 = vadd.f32 %v1988, %v2007
  %2009 = vdwg.mxu0
  %2010 = vmatpush.xpose.msra.mxu0 0.0
  %2011 = vmatpush.xpose.msra.mxu0 0.0
  %2012 = vmatpush.xpose.msra.mxu0 0.0
  %2013 = vmatpush.xpose.msra.mxu0 0.0
  %2014 = vmatpush.xpose.msra.mxu0 0.0
  %2015 = vmatpush.xpose.msra.mxu0 0.0
  %2016 = vmatpush.xpose.msra.mxu0 0.0
  %2017 = vmatpush.xpose.msra.mxu0 0.0
  %2018 = vmatpush.xpose.msra.mxu0 0.0
  %2019 = vmatpush.xpose.msra.mxu0 0.0
  %2020 = vmatpush.xpose.msra.mxu0 0.0
  %2021 = vmatpush.xpose.msra.mxu0 0.0
  %2022 = vmatpush.xpose.msra.mxu0 0.0
  %2023 = vmatpush.xpose.msra.mxu0 0.0
  %2024 = vmatpush.xpose.msra.mxu0 0.0
  %2025 = vmatpush.xpose.msra.mxu0 %v200
  %2026 = vmatmul.f32.gmra.mxu0 %v104
  %v2027 = vpop.f32.mrf.mxu0
  %v2028 = vadd.f32 %v2008, %v2027
  %2029 = vdwg.mxu0
  %2030 = vmatpush.xpose.msra.mxu0 0.0
  %2031 = vmatpush.xpose.msra.mxu0 0.0
  %2032 = vmatpush.xpose.msra.mxu0 0.0
  %2033 = vmatpush.xpose.msra.mxu0 0.0
  %2034 = vmatpush.xpose.msra.mxu0 0.0
  %2035 = vmatpush.xpose.msra.mxu0 0.0
  %2036 = vmatpush.xpose.msra.mxu0 0.0
  %2037 = vmatpush.xpose.msra.mxu0 0.0
  %2038 = vmatpush.xpose.msra.mxu0 0.0
  %2039 = vmatpush.xpose.msra.mxu0 0.0
  %2040 = vmatpush.xpose.msra.mxu0 0.0
  %2041 = vmatpush.xpose.msra.mxu0 0.0
  %2042 = vmatpush.xpose.msra.mxu0 0.0
  %2043 = vmatpush.xpose.msra.mxu0 0.0
  %2044 = vmatpush.xpose.msra.mxu0 0.0
  %2045 = vmatpush.xpose.msra.mxu0 %v201
  %2046 = vmatmul.f32.gmra.mxu0 %v105
  %v2047 = vpop.f32.mrf.mxu0
  %v2048 = vadd.f32 %v2028, %v2047
  %2049 = vdwg.mxu0
  %2050 = vmatpush.xpose.msra.mxu0 0.0
  %2051 = vmatpush.xpose.msra.mxu0 0.0
  %2052 = vmatpush.xpose.msra.mxu0 0.0
  %2053 = vmatpush.xpose.msra.mxu0 0.0
  %2054 = vmatpush.xpose.msra.mxu0 0.0
  %2055 = vmatpush.xpose.msra.mxu0 0.0
  %2056 = vmatpush.xpose.msra.mxu0 0.0
  %2057 = vmatpush.xpose.msra.mxu0 0.0
  %2058 = vmatpush.xpose.msra.mxu0 0.0
  %2059 = vmatpush.xpose.msra.mxu0 0.0
  %2060 = vmatpush.xpose.msra.mxu0 0.0
  %2061 = vmatpush.xpose.msra.mxu0 0.0
  %2062 = vmatpush.xpose.msra.mxu0 0.0
  %2063 = vmatpush.xpose.msra.mxu0 0.0
  %2064 = vmatpush.xpose.msra.mxu0 0.0
  %2065 = vmatpush.xpose.msra.mxu0 %v202
  %2066 = vmatmul.f32.gmra.mxu0 %v106
  %v2067 = vpop.f32.mrf.mxu0
  %v2068 = vadd.f32 %v2048, %v2067
  %2069 = vdwg.mxu0
  %2070 = vmatpush.xpose.msra.mxu0 0.0
  %2071 = vmatpush.xpose.msra.mxu0 0.0
  %2072 = vmatpush.xpose.msra.mxu0 0.0
  %2073 = vmatpush.xpose.msra.mxu0 0.0
  %2074 = vmatpush.xpose.msra.mxu0 0.0
  %2075 = vmatpush.xpose.msra.mxu0 0.0
  %2076 = vmatpush.xpose.msra.mxu0 0.0
  %2077 = vmatpush.xpose.msra.mxu0 0.0
  %2078 = vmatpush.xpose.msra.mxu0 0.0
  %2079 = vmatpush.xpose.msra.mxu0 0.0
  %2080 = vmatpush.xpose.msra.mxu0 0.0
  %2081 = vmatpush.xpose.msra.mxu0 0.0
  %2082 = vmatpush.xpose.msra.mxu0 0.0
  %2083 = vmatpush.xpose.msra.mxu0 0.0
  %2084 = vmatpush.xpose.msra.mxu0 0.0
  %2085 = vmatpush.xpose.msra.mxu0 %v203
  %2086 = vmatmul.f32.gmra.mxu0 %v107
  %v2087 = vpop.f32.mrf.mxu0
  %v2088 = vadd.f32 %v2068, %v2087
  %2089 = vdwg.mxu0
  %2090 = vmatpush.xpose.msra.mxu0 0.0
  %2091 = vmatpush.xpose.msra.mxu0 0.0
  %2092 = vmatpush.xpose.msra.mxu0 0.0
  %2093 = vmatpush.xpose.msra.mxu0 0.0
  %2094 = vmatpush.xpose.msra.mxu0 0.0
  %2095 = vmatpush.xpose.msra.mxu0 0.0
  %2096 = vmatpush.xpose.msra.mxu0 0.0
  %2097 = vmatpush.xpose.msra.mxu0 0.0
  %2098 = vmatpush.xpose.msra.mxu0 0.0
  %2099 = vmatpush.xpose.msra.mxu0 0.0
  %2100 = vmatpush.xpose.msra.mxu0 0.0
  %2101 = vmatpush.xpose.msra.mxu0 0.0
  %2102 = vmatpush.xpose.msra.mxu0 0.0
  %2103 = vmatpush.xpose.msra.mxu0 0.0
  %2104 = vmatpush.xpose.msra.mxu0 0.0
  %2105 = vmatpush.xpose.msra.mxu0 %v204
  %2106 = vmatmul.f32.gmra.mxu0 %v108
  %v2107 = vpop.f32.mrf.mxu0
  %v2108 = vadd.f32 %v2088, %v2107
  %2109 = vdwg.mxu0
  %2110 = vmatpush.xpose.msra.mxu0 0.0
  %2111 = vmatpush.xpose.msra.mxu0 0.0
  %2112 = vmatpush.xpose.msra.mxu0 0.0
  %2113 = vmatpush.xpose.msra.mxu0 0.0
  %2114 = vmatpush.xpose.msra.mxu0 0.0
  %2115 = vmatpush.xpose.msra.mxu0 0.0
  %2116 = vmatpush.xpose.msra.mxu0 0.0
  %2117 = vmatpush.xpose.msra.mxu0 0.0
  %2118 = vmatpush.xpose.msra.mxu0 0.0
  %2119 = vmatpush.xpose.msra.mxu0 0.0
  %2120 = vmatpush.xpose.msra.mxu0 0.0
  %2121 = vmatpush.xpose.msra.mxu0 0.0
  %2122 = vmatpush.xpose.msra.mxu0 0.0
  %2123 = vmatpush.xpose.msra.mxu0 0.0
  %2124 = vmatpush.xpose.msra.mxu0 0.0
  %2125 = vmatpush.xpose.msra.mxu0 %v205
  %2126 = vmatmul.f32.gmra.mxu0 %v109
  %v2127 = vpop.f32.mrf.mxu0
  %v2128 = vadd.f32 %v2108, %v2127
  %2129 = vdwg.mxu0
  %vm2130 = vcmask 64512
  %2131 = vst.msk [vmem:[%s3] sm:$0xff] %vm2130, %v2128
  // Predicated region
  $region14: #{linear_classifier_forward.1} parent=0 // pred_check
    _
  $region15: #{linear_classifier_forward.1} parent=0 // pred_check_branch
    %2133 = sbr.rel (0) target = $region17
  $region16: #{linear_classifier_forward.1} parent=0 // pred_region
    _
  $region17: #{linear_classifier_forward.1} parent=0 // pred_fallthru
    _
  // Predicated region
  $region18: #{linear_classifier_forward.1} parent=0 // pred_check
    _
  $region19: #{linear_classifier_forward.1} parent=0 // pred_check_branch
    %2135 = sbr.rel (0) target = $region21
  $region20: #{linear_classifier_forward.1} parent=0 // pred_region
    _
  $region21: #{linear_classifier_forward.1} parent=0 // pred_fallthru
    _

</llo_original>
